<compile_context>
chip_gen: v7x
topology: tpu7x:2x2x1
jax: 0.10.0
libtpu: 0.0.40
codegen_flags: <defaults>
</compile_context>

<pallas_src>
import functools

import numpy as np
import jax
import jax.numpy as jnp
from jax.experimental import pallas as pl
from jax.experimental.pallas import tpu as pltpu

BN_EPS = 1e-5


# ------------------------- fused Pallas kernel -------------------------

def _bottleneck_kernel(x_ref, w1_ref, b1_ref, w2_ref, b2_ref, w3_ref, b3_ref,
                       wd_ref, bd_ref, mask_ref, sub_ref, o_ref,
                       *, n_imgs, M2, shifts):
    """Entire Bottleneck forward for one batch block; all intermediates VMEM.

    x_ref   : (n_imgs, in_c, H*W)       channels on sublanes, spatial on lanes
    w1_ref  : (out_c, in_c)             BN-folded 1x1 conv1
    w2_ref  : (out_c, 9*out_c)          BN-folded, block-diagonal grouped 3x3,
                                        fused over the 9 taps (K = 9*out_c)
    w3_ref  : (out_c, out_c)            BN-folded 1x1 conv3
    wd_ref  : (out_c, in_c)             BN-folded 1x1 stride-s downsample
    b*_ref  : (out_c, 1)                per-channel biases (lane-broadcast)
    mask_ref: (9, 1, L)                 per-tap zero-padding validity masks
    sub_ref : (L, Lo)                   0/1 stride-s spatial subsample matrix
    o_ref   : (n_imgs, out_c, Ho*Wo)
    """
    # Pack the batch block along lanes -> (in_c, L): fully lane-dense.
    if n_imgs == 1:
        x_all = x_ref[0]
    else:
        x_all = jnp.concatenate([x_ref[n] for n in range(n_imgs)], axis=1)

    # conv1: 1x1 + folded BN + ReLU  -> x1 (out_c, L)
    x1 = jnp.dot(w1_ref[...], x_all, preferred_element_type=jnp.float32)
    x1 = jnp.maximum(x1 + b1_ref[...], 0.0)

    # TODO(synk): NEW_BLOCK / getOperator (cv2 Sobel/Scharr/Laplacian bank)
    # only runs when channels==24 and H==100; unreachable at these shapes.

    # conv2: grouped 3x3, stride s, pad 1, folded BN, ReLU.
    # Each tap is x1 shifted along the flattened-spatial lane axis (XLU roll)
    # and zeroed where the tap falls outside its image (precomputed mask).
    # The 9 taps are stacked along sublanes and contracted in ONE matmul
    # against the (out_c, 9*out_c) fused weight; the full-resolution result is
    # then subsampled at the stride-s centers with a precomputed 0/1 matrix.
    tap_rows = []
    for t in range(9):
        if shifts[t] == 0:
            tap_rows.append(x1)                       # center tap, never OOB
        else:
            rolled = pltpu.roll(x1, shift=shifts[t], axis=1)
            tap_rows.append(rolled * mask_ref[t])     # mask_ref[t]: (1, L)
    stacked = jnp.concatenate(tap_rows, axis=0)       # (9*out_c, L)
    y2_full = jnp.dot(w2_ref[...], stacked,
                      preferred_element_type=jnp.float32)      # (out_c, L)
    y2 = jnp.dot(y2_full, sub_ref[...],
                 preferred_element_type=jnp.float32)           # (out_c, Lo)
    x2 = jnp.maximum(y2 + b2_ref[...], 0.0)

    # se: Identity (se_ratio=0.0); dropout: Identity (drop_ratio=0.0)

    # downsample shortcut: 1x1 conv stride s + folded BN (no act) on the
    # ORIGINAL input; reuses the same 0/1 subsample matrix.
    xs = jnp.dot(x_all, sub_ref[...],
                 preferred_element_type=jnp.float32)           # (in_c, Lo)
    sc = jnp.dot(wd_ref[...], xs,
                 preferred_element_type=jnp.float32) + bd_ref[...]

    # conv3 (1x1 + folded BN, no act) + residual add + final ReLU (ac3)
    y = jnp.dot(w3_ref[...], x2, preferred_element_type=jnp.float32)
    y = jnp.maximum(y + b3_ref[...] + sc, 0.0)                 # (out_c, Lo)

    # Emit as (n_imgs, out_c, Ho*Wo): no wrapper-side transpose needed.
    for n in range(n_imgs):
        o_ref[n] = y[:, n * M2:(n + 1) * M2]


# ---------------- host-side gather constants (masks / shifts / subsample) ---

def _make_gather_constants(n_imgs, H, W, stride):
    """Static per-tap lane shifts, validity masks and stride-subsample matrix."""
    HW = H * W
    L = n_imgs * HW
    Ho = (H - 1) // stride + 1
    Wo = (W - 1) // stride + 1
    M2 = Ho * Wo
    Lo = n_imgs * M2

    pos = np.arange(L)
    hh = (pos % HW) // W
    ww = pos % W

    shifts = []
    masks = np.zeros((9, 1, L), np.float32)
    for kh in range(3):
        for kw in range(3):
            off = (kh - 1) * W + (kw - 1)
            shifts.append(int((-off) % L))            # roll so out[p] = x[p+off]
            hs = hh + (kh - 1)
            ws = ww + (kw - 1)
            valid = (hs >= 0) & (hs < H) & (ws >= 0) & (ws < W)
            masks[kh * 3 + kw, 0, :] = valid.astype(np.float32)

    sub = np.zeros((L, Lo), np.float32)
    for n in range(n_imgs):
        for ho in range(Ho):
            for wo in range(Wo):
                q = n * HW + (ho * stride) * W + (wo * stride)
                p = n * M2 + ho * Wo + wo
                sub[q, p] = 1.0

    return jnp.asarray(masks), jnp.asarray(sub), tuple(shifts), Ho, Wo


# ------------------------- forward wrapper -------------------------

def bottleneck_forward(x_nchw, params, *, stride, images_per_block=None):
    N, in_c, H, W = x_nchw.shape
    out_c = params["w1f"].shape[0]
    if images_per_block is None:
        # One fat grid step (best for single-TC v5e/v6e).  On v7x with larger
        # batches, pass images_per_block=N//2 so grid=(2,) keeps both TCs busy.
        images_per_block = N
    assert N % images_per_block == 0
    ipb = images_per_block

    HW = H * W
    masks, sub, shifts, Ho, Wo = _make_gather_constants(ipb, H, W, stride)
    M2 = Ho * Wo
    L = ipb * HW
    Lo = ipb * M2

    # NCHW -> (N, in_c, H*W): channels on sublanes, spatial on lanes.
    # This is a pure reshape - no transpose on either side of the kernel.
    x = x_nchw.reshape(N, in_c, HW)

    kernel = functools.partial(_bottleneck_kernel,
                               n_imgs=ipb, M2=M2, shifts=shifts)

    out = pl.pallas_call(
        kernel,
        out_shape=jax.ShapeDtypeStruct((N, out_c, M2), jnp.float32),
        grid=(N // ipb,),
        in_specs=[
            pl.BlockSpec((ipb, in_c, HW), lambda b: (b, 0, 0)),
            pl.BlockSpec((out_c, in_c), lambda b: (0, 0)),       # w1f
            pl.BlockSpec((out_c, 1), lambda b: (0, 0)),          # b1
            pl.BlockSpec((out_c, 9 * out_c), lambda b: (0, 0)),  # w2f (fused)
            pl.BlockSpec((out_c, 1), lambda b: (0, 0)),          # b2
            pl.BlockSpec((out_c, out_c), lambda b: (0, 0)),      # w3f
            pl.BlockSpec((out_c, 1), lambda b: (0, 0)),          # b3
            pl.BlockSpec((out_c, in_c), lambda b: (0, 0)),       # wdf
            pl.BlockSpec((out_c, 1), lambda b: (0, 0)),          # bd
            pl.BlockSpec((9, 1, L), lambda b: (0, 0, 0)),        # tap masks
            pl.BlockSpec((L, Lo), lambda b: (0, 0)),             # subsample
        ],
        out_specs=pl.BlockSpec((ipb, out_c, M2), lambda b: (b, 0, 0)),
        compiler_params=pltpu.CompilerParams(
            dimension_semantics=("parallel",)),
    )(x, params["w1f"], params["b1"], params["w2f"], params["b2"],
      params["w3f"], params["b3"], params["wdf"], params["bd"],
      masks, sub)

    # (N, out_c, Ho*Wo) -> NCHW via a free reshape (no transpose).
    return out.reshape(N, out_c, Ho, Wo)


# ------------------------- pure-JAX reference (correctness check) ---------

def reference_forward(x_nchw, params, *, stride):
    N, in_c, H, W = x_nchw.shape
    out_c = params["w1f"].shape[0]
    Ho = (H - 1) // stride + 1
    Wo = (W - 1) // stride + 1
    x = jnp.transpose(x_nchw, (0, 2, 3, 1))            # NHWC
    b1 = params["b1"][:, 0]
    b2 = params["b2"][:, 0]
    b3 = params["b3"][:, 0]
    bd = params["bd"][:, 0]

    x1 = jax.nn.relu(jnp.einsum("nhwc,oc->nhwo", x, params["w1f"]) + b1)
    xp = jnp.pad(x1, ((0, 0), (1, 1), (1, 1), (0, 0)))
    w2 = jnp.transpose(params["w2f"].reshape(out_c, 9, out_c), (1, 0, 2))
    acc = jnp.zeros((N, Ho, Wo, out_c), jnp.float32)
    for kh in range(3):
        for kw in range(3):
            t = xp[:, kh:kh + (Ho - 1) * stride + 1:stride,
                   kw:kw + (Wo - 1) * stride + 1:stride, :]
            acc = acc + jnp.einsum("nhwc,oc->nhwo", t, w2[kh * 3 + kw])
    x2 = jax.nn.relu(acc + b2)
    sc = jnp.einsum("nhwc,oc->nhwo", x[:, ::stride, ::stride, :],
                    params["wdf"]) + bd
    y = jax.nn.relu(jnp.einsum("nhwc,oc->nhwo", x2, params["w3f"]) + b3 + sc)
    return jnp.transpose(y, (0, 3, 1, 2))


# ------------------------- deterministic params (BN folded) ---------------

def make_params(key, in_c, out_c, groups):
    keys = jax.random.split(key, 8)

    def bn(k, c):
        k1, k2, k3, k4 = jax.random.split(k, 4)
        gamma = jax.random.uniform(k1, (c,), minval=0.5, maxval=1.5)
        beta = jax.random.normal(k2, (c,)) * 0.1
        mean = jax.random.normal(k3, (c,)) * 0.1
        var = jax.random.uniform(k4, (c,), minval=0.5, maxval=1.5)
        scale = gamma / jnp.sqrt(var + BN_EPS)
        bias = beta - mean * scale
        return scale.astype(jnp.float32), bias.astype(jnp.float32)

    # conv1 1x1: PyTorch weight (out_c, in_c, 1, 1) -> (out_c, in_c)
    w1 = (jax.random.normal(keys[0], (out_c, in_c)) * 0.1).astype(jnp.float32)
    s1, b1 = bn(keys[1], out_c)

    # conv2 3x3 grouped: PyTorch weight (out_c, out_c//groups, 3, 3);
    # scatter into dense block-diagonal per-tap weights (9, out_c, out_c)
    # [t, o, c], fold BN, then fuse taps: (out_c, 9*out_c), col k = t*out_c+c.
    cpg = out_c // groups
    w2_t = np.asarray(jax.random.normal(keys[2], (out_c, cpg, 3, 3))) * 0.1
    w2 = np.zeros((9, out_c, out_c), np.float32)
    for o in range(out_c):
        g = o // cpg
        for kh in range(3):
            for kw in range(3):
                w2[kh * 3 + kw, o, g * cpg:(g + 1) * cpg] = w2_t[o, :, kh, kw]
    s2, b2 = bn(keys[3], out_c)
    w2f = (jnp.asarray(w2) * s2[None, :, None])
    w2f = jnp.transpose(w2f, (1, 0, 2)).reshape(out_c, 9 * out_c)

    # conv3 1x1
    w3 = (jax.random.normal(keys[4], (out_c, out_c)) * 0.1).astype(jnp.float32)
    s3, b3 = bn(keys[5], out_c)

    # downsample 1x1 (stride s)
    wd = (jax.random.normal(keys[6], (out_c, in_c)) * 0.1).astype(jnp.float32)
    sd, bd = bn(keys[7], out_c)

    return dict(
        w1f=w1 * s1[:, None], b1=b1.reshape(out_c, 1),
        w2f=w2f, b2=b2.reshape(out_c, 1),
        w3f=w3 * s3[:, None], b3=b3.reshape(out_c, 1),
        wdf=wd * sd[:, None], bd=bd.reshape(out_c, 1),
    )


# ------------------------- main -------------------------

if __name__ == "__main__":
    key = jax.random.PRNGKey(0)
    kx, kp = jax.random.split(key)

    N, in_c, H, W = 2, 4, 16, 16
    out_c, stride, group_width = 8, 2, 4
    groups = out_c // group_width  # 2

    x = jax.random.normal(kx, (N, in_c, H, W), dtype=jnp.float32)
    params = make_params(kp, in_c, out_c, groups)

    fwd = jax.jit(functools.partial(bottleneck_forward, stride=stride))
    out = fwd(x, params)
    jax.block_until_ready(out)

    Ho = (H - 1) // stride + 1
    assert out.shape == (N, out_c, Ho, Ho), out.shape

    ref = reference_forward(x, params, stride=stride)
    err = float(jnp.max(jnp.abs(out - ref)))
    assert jnp.allclose(out, ref, atol=1e-4, rtol=1e-4), err
    assert bool(jnp.all(out >= 0.0))  # final ReLU
    print("KERNEL_OK")
</pallas_src>

<mosaic_0001>
module attributes {stable_mosaic.version = 11 : i64} {
  func.func @_bottleneck_kernel(%arg0: i32, %arg1: memref<2x4x256xf32, #tpu.memory_space<vmem>>, %arg2: memref<8x4xf32, #tpu.memory_space<vmem>>, %arg3: memref<8x1xf32, #tpu.memory_space<vmem>>, %arg4: memref<8x72xf32, #tpu.memory_space<vmem>>, %arg5: memref<8x1xf32, #tpu.memory_space<vmem>>, %arg6: memref<8x8xf32, #tpu.memory_space<vmem>>, %arg7: memref<8x1xf32, #tpu.memory_space<vmem>>, %arg8: memref<8x4xf32, #tpu.memory_space<vmem>>, %arg9: memref<8x1xf32, #tpu.memory_space<vmem>>, %arg10: memref<9x1x512xf32, #tpu.memory_space<vmem>>, %arg11: memref<512x128xf32, #tpu.memory_space<vmem>>, %arg12: memref<2x8x64xf32, #tpu.memory_space<vmem>>) attributes {dimension_semantics = [#tpu.dimension_semantics<parallel>], iteration_bounds = array<i64: 1>, scalar_prefetch = 0 : i64, scratch_operands = 0 : i64, tpu.core_type = #tpu.core_type<tc>, window_params = [{transform_indices = @transform_0, window_bounds = array<i64: 2, 4, 256>}, {pipeline_mode = #tpu.pipeline_mode<synchronous>, transform_indices = @transform_1, window_bounds = array<i64: 8, 4>}, {pipeline_mode = #tpu.pipeline_mode<synchronous>, transform_indices = @transform_2, window_bounds = array<i64: 8, 1>}, {pipeline_mode = #tpu.pipeline_mode<synchronous>, transform_indices = @transform_3, window_bounds = array<i64: 8, 72>}, {pipeline_mode = #tpu.pipeline_mode<synchronous>, transform_indices = @transform_4, window_bounds = array<i64: 8, 1>}, {pipeline_mode = #tpu.pipeline_mode<synchronous>, transform_indices = @transform_5, window_bounds = array<i64: 8, 8>}, {pipeline_mode = #tpu.pipeline_mode<synchronous>, transform_indices = @transform_6, window_bounds = array<i64: 8, 1>}, {pipeline_mode = #tpu.pipeline_mode<synchronous>, transform_indices = @transform_7, window_bounds = array<i64: 8, 4>}, {pipeline_mode = #tpu.pipeline_mode<synchronous>, transform_indices = @transform_8, window_bounds = array<i64: 8, 1>}, {pipeline_mode = #tpu.pipeline_mode<synchronous>, transform_indices = @transform_9, window_bounds = array<i64: 9, 1, 512>}, {pipeline_mode = #tpu.pipeline_mode<synchronous>, transform_indices = @transform_10, window_bounds = array<i64: 512, 128>}, {transform_indices = @transform_11, window_bounds = array<i64: 2, 8, 64>}]} {
    %c0 = arith.constant 0 : index
    %c0_0 = arith.constant 0 : index
    %c0_1 = arith.constant 0 : index
    %0 = vector.load %arg1[%c0, %c0_0, %c0_1] : memref<2x4x256xf32, #tpu.memory_space<vmem>>, vector<1x4x256xf32>
    %1 = vector.shape_cast %0 : vector<1x4x256xf32> to vector<4x256xf32>
    %c1 = arith.constant 1 : index
    %c0_2 = arith.constant 0 : index
    %c0_3 = arith.constant 0 : index
    %2 = vector.load %arg1[%c1, %c0_2, %c0_3] : memref<2x4x256xf32, #tpu.memory_space<vmem>>, vector<1x4x256xf32>
    %3 = vector.shape_cast %2 : vector<1x4x256xf32> to vector<4x256xf32>
    %4 = tpu.concatenate %1, %3 in 1 : vector<4x256xf32>, vector<4x256xf32> -> vector<4x512xf32>
    %c0_4 = arith.constant 0 : index
    %c0_5 = arith.constant 0 : index
    %5 = vector.load %arg2[%c0_4, %c0_5] : memref<8x4xf32, #tpu.memory_space<vmem>>, vector<8x4xf32>
    %cst = arith.constant dense<0.000000e+00> : vector<8x512xf32>
    %6 = tpu.matmul %5, %4, %cst {dimension_numbers = #tpu.dot_dimension_numbers<[1], [0], [0], [1], [0, 0, 1, 1], [], []>} : vector<8x4xf32>, vector<4x512xf32>, vector<8x512xf32> -> vector<8x512xf32>
    %c0_6 = arith.constant 0 : index
    %c0_7 = arith.constant 0 : index
    %7 = vector.load %arg3[%c0_6, %c0_7] : memref<8x1xf32, #tpu.memory_space<vmem>>, vector<8x1xf32>
    %8 = vector.broadcast %7 : vector<8x1xf32> to vector<8x512xf32>
    %9 = arith.addf %6, %8 : vector<8x512xf32>
    %cst_8 = arith.constant 0.000000e+00 : f32
    %10 = vector.broadcast %cst_8 : f32 to vector<8x512xf32>
    %11 = arith.maximumf %9, %10 : vector<8x512xf32>
    %c17_i32 = arith.constant 17 : i32
    %12 = tpu.dynamic_rotate %11 by %c17_i32 dim 1 : vector<8x512xf32>, i32 -> vector<8x512xf32>
    %c0_9 = arith.constant 0 : index
    %c0_10 = arith.constant 0 : index
    %c0_11 = arith.constant 0 : index
    %13 = vector.load %arg10[%c0_9, %c0_10, %c0_11] : memref<9x1x512xf32, #tpu.memory_space<vmem>>, vector<1x1x512xf32>
    %14 = vector.shape_cast %13 : vector<1x1x512xf32> to vector<1x512xf32>
    %15 = vector.broadcast %14 : vector<1x512xf32> to vector<8x512xf32>
    %16 = arith.mulf %12, %15 : vector<8x512xf32>
    %c16_i32 = arith.constant 16 : i32
    %17 = tpu.dynamic_rotate %11 by %c16_i32 dim 1 : vector<8x512xf32>, i32 -> vector<8x512xf32>
    %c1_12 = arith.constant 1 : index
    %c0_13 = arith.constant 0 : index
    %c0_14 = arith.constant 0 : index
    %18 = vector.load %arg10[%c1_12, %c0_13, %c0_14] : memref<9x1x512xf32, #tpu.memory_space<vmem>>, vector<1x1x512xf32>
    %19 = vector.shape_cast %18 : vector<1x1x512xf32> to vector<1x512xf32>
    %20 = vector.broadcast %19 : vector<1x512xf32> to vector<8x512xf32>
    %21 = arith.mulf %17, %20 : vector<8x512xf32>
    %c15_i32 = arith.constant 15 : i32
    %22 = tpu.dynamic_rotate %11 by %c15_i32 dim 1 : vector<8x512xf32>, i32 -> vector<8x512xf32>
    %c2 = arith.constant 2 : index
    %c0_15 = arith.constant 0 : index
    %c0_16 = arith.constant 0 : index
    %23 = vector.load %arg10[%c2, %c0_15, %c0_16] : memref<9x1x512xf32, #tpu.memory_space<vmem>>, vector<1x1x512xf32>
    %24 = vector.shape_cast %23 : vector<1x1x512xf32> to vector<1x512xf32>
    %25 = vector.broadcast %24 : vector<1x512xf32> to vector<8x512xf32>
    %26 = arith.mulf %22, %25 : vector<8x512xf32>
    %c1_i32 = arith.constant 1 : i32
    %27 = tpu.dynamic_rotate %11 by %c1_i32 dim 1 : vector<8x512xf32>, i32 -> vector<8x512xf32>
    %c3 = arith.constant 3 : index
    %c0_17 = arith.constant 0 : index
    %c0_18 = arith.constant 0 : index
    %28 = vector.load %arg10[%c3, %c0_17, %c0_18] : memref<9x1x512xf32, #tpu.memory_space<vmem>>, vector<1x1x512xf32>
    %29 = vector.shape_cast %28 : vector<1x1x512xf32> to vector<1x512xf32>
    %30 = vector.broadcast %29 : vector<1x512xf32> to vector<8x512xf32>
    %31 = arith.mulf %27, %30 : vector<8x512xf32>
    %c511_i32 = arith.constant 511 : i32
    %32 = tpu.dynamic_rotate %11 by %c511_i32 dim 1 : vector<8x512xf32>, i32 -> vector<8x512xf32>
    %c5 = arith.constant 5 : index
    %c0_19 = arith.constant 0 : index
    %c0_20 = arith.constant 0 : index
    %33 = vector.load %arg10[%c5, %c0_19, %c0_20] : memref<9x1x512xf32, #tpu.memory_space<vmem>>, vector<1x1x512xf32>
    %34 = vector.shape_cast %33 : vector<1x1x512xf32> to vector<1x512xf32>
    %35 = vector.broadcast %34 : vector<1x512xf32> to vector<8x512xf32>
    %36 = arith.mulf %32, %35 : vector<8x512xf32>
    %c497_i32 = arith.constant 497 : i32
    %37 = tpu.dynamic_rotate %11 by %c497_i32 dim 1 : vector<8x512xf32>, i32 -> vector<8x512xf32>
    %c6 = arith.constant 6 : index
    %c0_21 = arith.constant 0 : index
    %c0_22 = arith.constant 0 : index
    %38 = vector.load %arg10[%c6, %c0_21, %c0_22] : memref<9x1x512xf32, #tpu.memory_space<vmem>>, vector<1x1x512xf32>
    %39 = vector.shape_cast %38 : vector<1x1x512xf32> to vector<1x512xf32>
    %40 = vector.broadcast %39 : vector<1x512xf32> to vector<8x512xf32>
    %41 = arith.mulf %37, %40 : vector<8x512xf32>
    %c496_i32 = arith.constant 496 : i32
    %42 = tpu.dynamic_rotate %11 by %c496_i32 dim 1 : vector<8x512xf32>, i32 -> vector<8x512xf32>
    %c7 = arith.constant 7 : index
    %c0_23 = arith.constant 0 : index
    %c0_24 = arith.constant 0 : index
    %43 = vector.load %arg10[%c7, %c0_23, %c0_24] : memref<9x1x512xf32, #tpu.memory_space<vmem>>, vector<1x1x512xf32>
    %44 = vector.shape_cast %43 : vector<1x1x512xf32> to vector<1x512xf32>
    %45 = vector.broadcast %44 : vector<1x512xf32> to vector<8x512xf32>
    %46 = arith.mulf %42, %45 : vector<8x512xf32>
    %c495_i32 = arith.constant 495 : i32
    %47 = tpu.dynamic_rotate %11 by %c495_i32 dim 1 : vector<8x512xf32>, i32 -> vector<8x512xf32>
    %c8 = arith.constant 8 : index
    %c0_25 = arith.constant 0 : index
    %c0_26 = arith.constant 0 : index
    %48 = vector.load %arg10[%c8, %c0_25, %c0_26] : memref<9x1x512xf32, #tpu.memory_space<vmem>>, vector<1x1x512xf32>
    %49 = vector.shape_cast %48 : vector<1x1x512xf32> to vector<1x512xf32>
    %50 = vector.broadcast %49 : vector<1x512xf32> to vector<8x512xf32>
    %51 = arith.mulf %47, %50 : vector<8x512xf32>
    %52 = tpu.concatenate %16, %21, %26, %31, %11, %36, %41, %46, %51 in 0 : vector<8x512xf32>, vector<8x512xf32>, vector<8x512xf32>, vector<8x512xf32>, vector<8x512xf32>, vector<8x512xf32>, vector<8x512xf32>, vector<8x512xf32>, vector<8x512xf32> -> vector<72x512xf32>
    %c0_27 = arith.constant 0 : index
    %c0_28 = arith.constant 0 : index
    %53 = vector.load %arg4[%c0_27, %c0_28] : memref<8x72xf32, #tpu.memory_space<vmem>>, vector<8x72xf32>
    %cst_29 = arith.constant dense<0.000000e+00> : vector<8x512xf32>
    %54 = tpu.matmul %53, %52, %cst_29 {dimension_numbers = #tpu.dot_dimension_numbers<[1], [0], [0], [1], [0, 0, 1, 1], [], []>} : vector<8x72xf32>, vector<72x512xf32>, vector<8x512xf32> -> vector<8x512xf32>
    %c0_30 = arith.constant 0 : index
    %c0_31 = arith.constant 0 : index
    %55 = vector.load %arg11[%c0_30, %c0_31] : memref<512x128xf32, #tpu.memory_space<vmem>>, vector<512x128xf32>
    %cst_32 = arith.constant dense<0.000000e+00> : vector<8x128xf32>
    %56 = tpu.matmul %54, %55, %cst_32 {dimension_numbers = #tpu.dot_dimension_numbers<[1], [0], [0], [1], [0, 0, 1, 1], [], []>} : vector<8x512xf32>, vector<512x128xf32>, vector<8x128xf32> -> vector<8x128xf32>
    %c0_33 = arith.constant 0 : index
    %c0_34 = arith.constant 0 : index
    %57 = vector.load %arg5[%c0_33, %c0_34] : memref<8x1xf32, #tpu.memory_space<vmem>>, vector<8x1xf32>
    %58 = vector.broadcast %57 : vector<8x1xf32> to vector<8x128xf32>
    %59 = arith.addf %56, %58 : vector<8x128xf32>
    %cst_35 = arith.constant 0.000000e+00 : f32
    %60 = vector.broadcast %cst_35 : f32 to vector<8x128xf32>
    %61 = arith.maximumf %59, %60 : vector<8x128xf32>
    %c0_36 = arith.constant 0 : index
    %c0_37 = arith.constant 0 : index
    %62 = vector.load %arg11[%c0_36, %c0_37] : memref<512x128xf32, #tpu.memory_space<vmem>>, vector<512x128xf32>
    %cst_38 = arith.constant dense<0.000000e+00> : vector<4x128xf32>
    %63 = tpu.matmul %4, %62, %cst_38 {dimension_numbers = #tpu.dot_dimension_numbers<[1], [0], [0], [1], [0, 0, 1, 1], [], []>} : vector<4x512xf32>, vector<512x128xf32>, vector<4x128xf32> -> vector<4x128xf32>
    %c0_39 = arith.constant 0 : index
    %c0_40 = arith.constant 0 : index
    %64 = vector.load %arg8[%c0_39, %c0_40] : memref<8x4xf32, #tpu.memory_space<vmem>>, vector<8x4xf32>
    %cst_41 = arith.constant dense<0.000000e+00> : vector<8x128xf32>
    %65 = tpu.matmul %64, %63, %cst_41 {dimension_numbers = #tpu.dot_dimension_numbers<[1], [0], [0], [1], [0, 0, 1, 1], [], []>} : vector<8x4xf32>, vector<4x128xf32>, vector<8x128xf32> -> vector<8x128xf32>
    %c0_42 = arith.constant 0 : index
    %c0_43 = arith.constant 0 : index
    %66 = vector.load %arg9[%c0_42, %c0_43] : memref<8x1xf32, #tpu.memory_space<vmem>>, vector<8x1xf32>
    %67 = vector.broadcast %66 : vector<8x1xf32> to vector<8x128xf32>
    %68 = arith.addf %65, %67 : vector<8x128xf32>
    %c0_44 = arith.constant 0 : index
    %c0_45 = arith.constant 0 : index
    %69 = vector.load %arg6[%c0_44, %c0_45] : memref<8x8xf32, #tpu.memory_space<vmem>>, vector<8x8xf32>
    %cst_46 = arith.constant dense<0.000000e+00> : vector<8x128xf32>
    %70 = tpu.matmul %69, %61, %cst_46 {dimension_numbers = #tpu.dot_dimension_numbers<[1], [0], [0], [1], [0, 0, 1, 1], [], []>} : vector<8x8xf32>, vector<8x128xf32>, vector<8x128xf32> -> vector<8x128xf32>
    %c0_47 = arith.constant 0 : index
    %c0_48 = arith.constant 0 : index
    %71 = vector.load %arg7[%c0_47, %c0_48] : memref<8x1xf32, #tpu.memory_space<vmem>>, vector<8x1xf32>
    %72 = vector.broadcast %71 : vector<8x1xf32> to vector<8x128xf32>
    %73 = arith.addf %70, %72 : vector<8x128xf32>
    %74 = arith.addf %73, %68 : vector<8x128xf32>
    %cst_49 = arith.constant 0.000000e+00 : f32
    %75 = vector.broadcast %cst_49 : f32 to vector<8x128xf32>
    %76 = arith.maximumf %74, %75 : vector<8x128xf32>
    %77 = vector.extract_strided_slice %76 {offsets = [0, 0], sizes = [8, 64], strides = [1, 1]} : vector<8x128xf32> to vector<8x64xf32>
    %c0_50 = arith.constant 0 : index
    %c0_51 = arith.constant 0 : index
    %c0_52 = arith.constant 0 : index
    %78 = vector.load %arg12[%c0_50, %c0_51, %c0_52] : memref<2x8x64xf32, #tpu.memory_space<vmem>>, vector<1x8x64xf32>
    %79 = vector.shape_cast %78 : vector<1x8x64xf32> to vector<8x64xf32>
    %80 = vector.shape_cast %77 : vector<8x64xf32> to vector<1x8x64xf32>
    tpu.vector_store %arg12[%c0_50, %c0_51, %c0_52], %80 {strides = array<i32>} : memref<2x8x64xf32, #tpu.memory_space<vmem>>, vector<1x8x64xf32>,
    %81 = vector.extract_strided_slice %76 {offsets = [0, 64], sizes = [8, 64], strides = [1, 1]} : vector<8x128xf32> to vector<8x64xf32>
    %c1_53 = arith.constant 1 : index
    %c0_54 = arith.constant 0 : index
    %c0_55 = arith.constant 0 : index
    %82 = vector.load %arg12[%c1_53, %c0_54, %c0_55] : memref<2x8x64xf32, #tpu.memory_space<vmem>>, vector<1x8x64xf32>
    %83 = vector.shape_cast %82 : vector<1x8x64xf32> to vector<8x64xf32>
    %84 = vector.shape_cast %81 : vector<8x64xf32> to vector<1x8x64xf32>
    tpu.vector_store %arg12[%c1_53, %c0_54, %c0_55], %84 {strides = array<i32>} : memref<2x8x64xf32, #tpu.memory_space<vmem>>, vector<1x8x64xf32>,
    return
  }
  func.func @transform_0(%arg0: i32) -> (i32, i32, i32) {
    %c0_i32 = arith.constant 0 : i32
    %c0_i32_0 = arith.constant 0 : i32
    %c0_i32_1 = arith.constant 0 : i32
    return %arg0, %c0_i32, %c0_i32_0 : i32, i32, i32
  }
  func.func @transform_1(%arg0: i32) -> (i32, i32) {
    %c0_i32 = arith.constant 0 : i32
    %c0_i32_0 = arith.constant 0 : i32
    %c0_i32_1 = arith.constant 0 : i32
    return %c0_i32, %c0_i32_0 : i32, i32
  }
  func.func @transform_2(%arg0: i32) -> (i32, i32) {
    %c0_i32 = arith.constant 0 : i32
    %c0_i32_0 = arith.constant 0 : i32
    %c0_i32_1 = arith.constant 0 : i32
    return %c0_i32, %c0_i32_0 : i32, i32
  }
  func.func @transform_3(%arg0: i32) -> (i32, i32) {
    %c0_i32 = arith.constant 0 : i32
    %c0_i32_0 = arith.constant 0 : i32
    %c0_i32_1 = arith.constant 0 : i32
    return %c0_i32, %c0_i32_0 : i32, i32
  }
  func.func @transform_4(%arg0: i32) -> (i32, i32) {
    %c0_i32 = arith.constant 0 : i32
    %c0_i32_0 = arith.constant 0 : i32
    %c0_i32_1 = arith.constant 0 : i32
    return %c0_i32, %c0_i32_0 : i32, i32
  }
  func.func @transform_5(%arg0: i32) -> (i32, i32) {
    %c0_i32 = arith.constant 0 : i32
    %c0_i32_0 = arith.constant 0 : i32
    %c0_i32_1 = arith.constant 0 : i32
    return %c0_i32, %c0_i32_0 : i32, i32
  }
  func.func @transform_6(%arg0: i32) -> (i32, i32) {
    %c0_i32 = arith.constant 0 : i32
    %c0_i32_0 = arith.constant 0 : i32
    %c0_i32_1 = arith.constant 0 : i32
    return %c0_i32, %c0_i32_0 : i32, i32
  }
  func.func @transform_7(%arg0: i32) -> (i32, i32) {
    %c0_i32 = arith.constant 0 : i32
    %c0_i32_0 = arith.constant 0 : i32
    %c0_i32_1 = arith.constant 0 : i32
    return %c0_i32, %c0_i32_0 : i32, i32
  }
  func.func @transform_8(%arg0: i32) -> (i32, i32) {
    %c0_i32 = arith.constant 0 : i32
    %c0_i32_0 = arith.constant 0 : i32
    %c0_i32_1 = arith.constant 0 : i32
    return %c0_i32, %c0_i32_0 : i32, i32
  }
  func.func @transform_9(%arg0: i32) -> (i32, i32, i32) {
    %c0_i32 = arith.constant 0 : i32
    %c0_i32_0 = arith.constant 0 : i32
    %c0_i32_1 = arith.constant 0 : i32
    %c0_i32_2 = arith.constant 0 : i32
    return %c0_i32, %c0_i32_0, %c0_i32_1 : i32, i32, i32
  }
  func.func @transform_10(%arg0: i32) -> (i32, i32) {
    %c0_i32 = arith.constant 0 : i32
    %c0_i32_0 = arith.constant 0 : i32
    %c0_i32_1 = arith.constant 0 : i32
    return %c0_i32, %c0_i32_0 : i32, i32
  }
  func.func @transform_11(%arg0: i32) -> (i32, i32, i32) {
    %c0_i32 = arith.constant 0 : i32
    %c0_i32_0 = arith.constant 0 : i32
    %c0_i32_1 = arith.constant 0 : i32
    return %arg0, %c0_i32, %c0_i32_0 : i32, i32, i32
  }
}

</mosaic_0001>

<llo_original>
// kernel: bottleneck_forward.1
$region0: #{bottleneck_forward.1}
  #allocation0 [shape = 'u32[]', space=smem, size = 0x4, offset = 0x4, fixed_abs, tag = 'smem constant byte address 0x4 - core index']
  #allocation1 [shape = 'u32[144,128]{1,0:T(1,128)}', space=vmem, size = 0x12000, scoped, tag = 'internal scratch']
  %s0 = inlined_call_operand.vmem [shape: f32[2,4,256], index: 0, kind: input, shape index: {}]
  %s1 = inlined_call_operand.vmem [shape: f32[8,4], index: 1, kind: input, shape index: {}]
  %s2 = inlined_call_operand.vmem [shape: f32[8,1], index: 2, kind: input, shape index: {}]
  %s3 = inlined_call_operand.vmem [shape: f32[8,72], index: 3, kind: input, shape index: {}]
  %s4 = inlined_call_operand.vmem [shape: f32[8,1], index: 4, kind: input, shape index: {}]
  %s5 = inlined_call_operand.vmem [shape: f32[8,8], index: 5, kind: input, shape index: {}]
  %s6 = inlined_call_operand.vmem [shape: f32[8,1], index: 6, kind: input, shape index: {}]
  %s7 = inlined_call_operand.vmem [shape: f32[8,4], index: 7, kind: input, shape index: {}]
  %s8 = inlined_call_operand.vmem [shape: f32[8,1], index: 8, kind: input, shape index: {}]
  %s9 = inlined_call_operand.vmem [shape: f32[9,1,512], index: 9, kind: input, shape index: {}]
  %s10 = inlined_call_operand.hbm [shape: f32[512,128], index: 10, kind: input, shape index: {}]
  %s11 = inlined_call_operand.vmem [shape: f32[2,8,64], index: 11, kind: output, shape index: {}]
  %s12 = sld [smem:[#allocation0]]
  $region58: #{bottleneck_forward.1} parent=0
    _
  %s14 = ssub.s32 1, %s12
  %s15 = scalar_select 0, %s14, %s12
  $region1: #{bottleneck_forward.1} parent=0
    #allocation2 [shape = 'u8[262144]{0}', space=vmem, size = 0x40000, scoped, tag = 'input window, operand 10, single buffered']
    #allocation3 [shape = 's32[1]{0}', space=sflag, size = 0x4, scoped, tag = 'scoped memory for bottleneck_forward.1']
    %16 = vsyncpa [#allocation3], 0
    // Predicated region
    $region2: #{bottleneck_forward.1} parent=1 // pred_check
      _
    $region3: #{bottleneck_forward.1} parent=1 // pred_check_branch
      %18 = sbr.rel (0) target = $region5
    $region4: #{bottleneck_forward.1} parent=1 // pred_region
      _
    $region5: #{bottleneck_forward.1} parent=1 // pred_fallthru
      _
    // Predicated region
    $region6: #{bottleneck_forward.1} parent=1 // pred_check
      _
    $region7: #{bottleneck_forward.1} parent=1 // pred_check_branch
      %20 = sbr.rel (0) target = $region9
    $region8: #{bottleneck_forward.1} parent=1 // pred_region
      _
    $region9: #{bottleneck_forward.1} parent=1 // pred_fallthru
      _
    // Predicated region
    $region10: #{bottleneck_forward.1} parent=1 // pred_check
      _
    $region11: #{bottleneck_forward.1} parent=1 // pred_check_branch
      %22 = sbr.rel (0) target = $region13
    $region12: #{bottleneck_forward.1} parent=1 // pred_region
      _
    $region13: #{bottleneck_forward.1} parent=1 // pred_fallthru
      _
    // Predicated region
    $region14: #{bottleneck_forward.1} parent=1 // pred_check
      _
    $region15: #{bottleneck_forward.1} parent=1 // pred_check_branch
      %24 = sbr.rel (0) target = $region17
    $region16: #{bottleneck_forward.1} parent=1 // pred_region
      _
    $region17: #{bottleneck_forward.1} parent=1 // pred_fallthru
      _
    // Predicated region
    $region18: #{bottleneck_forward.1} parent=1 // pred_check
      _
    $region19: #{bottleneck_forward.1} parent=1 // pred_check_branch
      %26 = sbr.rel (0) target = $region21
    $region20: #{bottleneck_forward.1} parent=1 // pred_region
      _
    $region21: #{bottleneck_forward.1} parent=1 // pred_fallthru
      _
    // Predicated region
    $region22: #{bottleneck_forward.1} parent=1 // pred_check
      _
    $region23: #{bottleneck_forward.1} parent=1 // pred_check_branch
      %28 = sbr.rel (0) target = $region25
    $region24: #{bottleneck_forward.1} parent=1 // pred_region
      _
    $region25: #{bottleneck_forward.1} parent=1 // pred_fallthru
      _
    // Predicated region
    $region26: #{bottleneck_forward.1} parent=1 // pred_check
      _
    $region27: #{bottleneck_forward.1} parent=1 // pred_check_branch
      %30 = sbr.rel (0) target = $region29
    $region28: #{bottleneck_forward.1} parent=1 // pred_region
      _
    $region29: #{bottleneck_forward.1} parent=1 // pred_fallthru
      _
    // Predicated region
    $region30: #{bottleneck_forward.1} parent=1 // pred_check
      _
    $region31: #{bottleneck_forward.1} parent=1 // pred_check_branch
      %32 = sbr.rel (0) target = $region33
    $region32: #{bottleneck_forward.1} parent=1 // pred_region
      _
    $region33: #{bottleneck_forward.1} parent=1 // pred_fallthru
      _
    // Predicated region
    $region34: #{bottleneck_forward.1} parent=1 // pred_check
      _
    $region35: #{bottleneck_forward.1} parent=1 // pred_check_branch
      %34 = sbr.rel (0) target = $region37
    $region36: #{bottleneck_forward.1} parent=1 // pred_region
      _
    $region37: #{bottleneck_forward.1} parent=1 // pred_fallthru
      _
    // Predicated region
    $region38: #{bottleneck_forward.1} parent=1 // pred_check
      _
    $region39: #{bottleneck_forward.1} parent=1 // pred_check_branch
      %36 = sbr.rel (0) target = $region41
    $region40: #{bottleneck_forward.1} parent=1 // pred_region
      _
    $region41: #{bottleneck_forward.1} parent=1 // pred_fallthru
      _
    // Predicated region
    $region42: #{bottleneck_forward.1} parent=1 // pred_check
      _
    $region43: #{bottleneck_forward.1} parent=1 // pred_check_branch
      %38 = sbr.rel (0) target = $region45
    $region44: #{bottleneck_forward.1} parent=1 // pred_region
      %s40 = ssub.s32 8192, 8192
      %41 = vsyncadd [#allocation3], %s40
      %s42 = sshll.u32 [#allocation2], 4
      %s43 = int_to_ptr.vmem [resolvable:$true] %s42
      %48 = dma.hbm_to_vmem [thread:$0]  %s10, 8192, %s43, [#allocation3], 128, 128, 8
    $region45: #{bottleneck_forward.1} parent=1 // pred_fallthru
      _
    // Predicated region
    $region46: #{bottleneck_forward.1} parent=1 // pred_check
      _
    $region47: #{bottleneck_forward.1} parent=1 // pred_check_branch
      %50 = sbr.rel (0) target = $region49
    $region48: #{bottleneck_forward.1} parent=1 // pred_region
      %51 = dma.done [#allocation3], 8192
    $region49: #{bottleneck_forward.1} parent=1 // pred_fallthru
      _
    %v52 = vld [vmem:[%s0] sm:$0xff]
    %s53 = scalar_lea.vmem %s0, 8
    %v54 = vld [vmem:[%s53] sm:$0xff]
    %v56 = vcombine.high %v52, %v52
    %v59 = vcombine.high %v54, %v54
    %v61 = vld [vmem:[%s1] sm:$0xff]
    %v62 = vld [vmem:[%s2] sm:$0xff]
    %64 = vset.pattern.permute.xlu0 0
    %65 = vperm.xlu0 %64, %v62
    %v66 = vpop.permute.xlu0 %65
    %vm68 = vcmask 31744
    %v70 = vsel %vm68, %v61, 0
    %vm72 = vcmask 1043456
    %v73 = vsel %vm72, %v52, 0
    %v75 = vsel %vm72, %v56, 0
    %v77 = vsel %vm72, %v54, 0
    %v79 = vsel %vm72, %v59, 0
    %81 = vmatprep.subr.mxu0 %v75
    %82 = vmatpush1.msra.mxu0 %v73
    %83 = vmatprep.subr.mxu0 0.0
    %84 = vmatpush1.msra.mxu0 0.0
    %85 = vmatprep.subr.mxu0 0.0
    %86 = vmatpush1.msra.mxu0 0.0
    %87 = vmatprep.subr.mxu0 0.0
    %88 = vmatpush1.msra.mxu0 0.0
    %89 = vmatprep.subr.mxu0 0.0
    %90 = vmatpush1.msra.mxu0 0.0
    %91 = vmatprep.subr.mxu0 0.0
    %92 = vmatpush1.msra.mxu0 0.0
    %93 = vmatprep.subr.mxu0 0.0
    %94 = vmatpush1.msra.mxu0 0.0
    %95 = vmatprep.subr.mxu0 0.0
    %96 = vmatpush1.msra.mxu0 0.0
    %97 = vmatprep.subr.mxu0 0.0
    %98 = vmatpush1.msra.mxu0 0.0
    %99 = vmatprep.subr.mxu0 0.0
    %100 = vmatpush1.msra.mxu0 0.0
    %101 = vmatprep.subr.mxu0 0.0
    %102 = vmatpush1.msra.mxu0 0.0
    %103 = vmatprep.subr.mxu0 0.0
    %104 = vmatpush1.msra.mxu0 0.0
    %105 = vmatprep.subr.mxu0 0.0
    %106 = vmatpush1.msra.mxu0 0.0
    %107 = vmatprep.subr.mxu0 0.0
    %108 = vmatpush1.msra.mxu0 0.0
    %109 = vmatprep.subr.mxu0 0.0
    %110 = vmatpush1.msra.mxu0 0.0
    %111 = vmatprep.subr.mxu0 0.0
    %112 = vmatpush1.msra.mxu0 0.0
    %113 = vmatprep.subr.mxu0 0.0
    %114 = vmatpush1.msra.mxu0 0.0
    %115 = vmatprep.subr.mxu0 0.0
    %116 = vmatpush1.msra.mxu0 0.0
    %117 = vmatprep.subr.mxu0 0.0
    %118 = vmatpush1.msra.mxu0 0.0
    %119 = vmatprep.subr.mxu0 0.0
    %120 = vmatpush1.msra.mxu0 0.0
    %121 = vmatprep.subr.mxu0 0.0
    %122 = vmatpush1.msra.mxu0 0.0
    %123 = vmatprep.subr.mxu0 0.0
    %124 = vmatpush1.msra.mxu0 0.0
    %125 = vmatprep.subr.mxu0 0.0
    %126 = vmatpush1.msra.mxu0 0.0
    %127 = vmatprep.subr.mxu0 0.0
    %128 = vmatpush1.msra.mxu0 0.0
    %129 = vmatprep.subr.mxu0 0.0
    %130 = vmatpush1.msra.mxu0 0.0
    %131 = vmatprep.subr.mxu0 0.0
    %132 = vmatpush1.msra.mxu0 0.0
    %133 = vmatprep.subr.mxu0 0.0
    %134 = vmatpush1.msra.mxu0 0.0
    %135 = vmatprep.subr.mxu0 0.0
    %136 = vmatpush1.msra.mxu0 0.0
    %137 = vmatprep.subr.mxu0 0.0
    %138 = vmatpush1.msra.mxu0 0.0
    %139 = vmatprep.subr.mxu0 0.0
    %140 = vmatpush1.msra.mxu0 0.0
    %141 = vmatprep.subr.mxu0 0.0
    %142 = vmatpush1.msra.mxu0 0.0
    %143 = vmatprep.subr.mxu0 0.0
    %144 = vmatpush1.msra.mxu0 0.0
    %145 = vmatprep.mubr.f32.mxu0 0.0
    %146 = vmatmul.mubr.f32.gmra.mrb[0].mxu0 %v70
    %v147 = vpop.f32.mrb[0].mxu0
    %v148 = vadd.f32 %v66, %v147
    %v149 = vpop.f32.mrb[0].mxu0
    %v150 = vadd.f32 %v66, %v149
    %151 = vdwg.mxu0
    %152 = vmatprep.subr.mxu0 %v79
    %153 = vmatpush1.msra.mxu0 %v77
    %154 = vmatprep.subr.mxu0 0.0
    %155 = vmatpush1.msra.mxu0 0.0
    %156 = vmatprep.subr.mxu0 0.0
    %157 = vmatpush1.msra.mxu0 0.0
    %158 = vmatprep.subr.mxu0 0.0
    %159 = vmatpush1.msra.mxu0 0.0
    %160 = vmatprep.subr.mxu0 0.0
    %161 = vmatpush1.msra.mxu0 0.0
    %162 = vmatprep.subr.mxu0 0.0
    %163 = vmatpush1.msra.mxu0 0.0
    %164 = vmatprep.subr.mxu0 0.0
    %165 = vmatpush1.msra.mxu0 0.0
    %166 = vmatprep.subr.mxu0 0.0
    %167 = vmatpush1.msra.mxu0 0.0
    %168 = vmatprep.subr.mxu0 0.0
    %169 = vmatpush1.msra.mxu0 0.0
    %170 = vmatprep.subr.mxu0 0.0
    %171 = vmatpush1.msra.mxu0 0.0
    %172 = vmatprep.subr.mxu0 0.0
    %173 = vmatpush1.msra.mxu0 0.0
    %174 = vmatprep.subr.mxu0 0.0
    %175 = vmatpush1.msra.mxu0 0.0
    %176 = vmatprep.subr.mxu0 0.0
    %177 = vmatpush1.msra.mxu0 0.0
    %178 = vmatprep.subr.mxu0 0.0
    %179 = vmatpush1.msra.mxu0 0.0
    %180 = vmatprep.subr.mxu0 0.0
    %181 = vmatpush1.msra.mxu0 0.0
    %182 = vmatprep.subr.mxu0 0.0
    %183 = vmatpush1.msra.mxu0 0.0
    %184 = vmatprep.subr.mxu0 0.0
    %185 = vmatpush1.msra.mxu0 0.0
    %186 = vmatprep.subr.mxu0 0.0
    %187 = vmatpush1.msra.mxu0 0.0
    %188 = vmatprep.subr.mxu0 0.0
    %189 = vmatpush1.msra.mxu0 0.0
    %190 = vmatprep.subr.mxu0 0.0
    %191 = vmatpush1.msra.mxu0 0.0
    %192 = vmatprep.subr.mxu0 0.0
    %193 = vmatpush1.msra.mxu0 0.0
    %194 = vmatprep.subr.mxu0 0.0
    %195 = vmatpush1.msra.mxu0 0.0
    %196 = vmatprep.subr.mxu0 0.0
    %197 = vmatpush1.msra.mxu0 0.0
    %198 = vmatprep.subr.mxu0 0.0
    %199 = vmatpush1.msra.mxu0 0.0
    %200 = vmatprep.subr.mxu0 0.0
    %201 = vmatpush1.msra.mxu0 0.0
    %202 = vmatprep.subr.mxu0 0.0
    %203 = vmatpush1.msra.mxu0 0.0
    %204 = vmatprep.subr.mxu0 0.0
    %205 = vmatpush1.msra.mxu0 0.0
    %206 = vmatprep.subr.mxu0 0.0
    %207 = vmatpush1.msra.mxu0 0.0
    %208 = vmatprep.subr.mxu0 0.0
    %209 = vmatpush1.msra.mxu0 0.0
    %210 = vmatprep.subr.mxu0 0.0
    %211 = vmatpush1.msra.mxu0 0.0
    %212 = vmatprep.subr.mxu0 0.0
    %213 = vmatpush1.msra.mxu0 0.0
    %214 = vmatprep.subr.mxu0 0.0
    %215 = vmatpush1.msra.mxu0 0.0
    %216 = vmatprep.mubr.f32.mxu0 0.0
    %217 = vmatmul.mubr.f32.gmra.mrb[0].mxu0 %v70
    %v218 = vpop.f32.mrb[0].mxu0
    %v219 = vadd.f32 %v66, %v218
    %v220 = vpop.f32.mrb[0].mxu0
    %v221 = vadd.f32 %v66, %v220
    %222 = vdwg.mxu0
    %v223 = vmax.f32 %v148, 0.0
    %v224 = vmax.f32 %v150, 0.0
    %v225 = vmax.f32 %v219, 0.0
    %v226 = vmax.f32 %v221, 0.0
    %227 = vrot.lane.b32.xlu0 %v223, 17
    %v228 = vpop.permute.xlu0 %227
    %229 = vrot.lane.b32.xlu0 %v224, 17
    %v230 = vpop.permute.xlu0 %229
    %231 = vrot.lane.b32.xlu0 %v225, 17
    %v232 = vpop.permute.xlu0 %231
    %233 = vrot.lane.b32.xlu0 %v226, 17
    %v234 = vpop.permute.xlu0 %233
    %v235 = vlaneseq
    %v236 = vand.u32 %v235, 127
    %vm237 = vcmp.lt.s32.totalorder %v236, 17
    %v238 = vsel %vm237, %v232, %v234
    %v239 = vsel %vm237, %v230, %v232
    %v240 = vsel %vm237, %v228, %v230
    %v241 = vsel %vm237, %v234, %v228
    %v242 = vld [vmem:[%s9] sm:$0xf]
    %v244 = vlaneseq
    %v245 = vshrl.u32 %v244, 7
    %v246 = vsub.s32 0, %v245
    %v247 = vrot.slane %v242, %v246
    %v248 = vlaneseq
    %v249 = vshrl.u32 %v248, 7
    %v250 = vsub.s32 1, %v249
    %v251 = vrot.slane %v242, %v250
    %v252 = vlaneseq
    %v253 = vshrl.u32 %v252, 7
    %v254 = vsub.s32 2, %v253
    %v255 = vrot.slane %v242, %v254
    %v256 = vlaneseq
    %v257 = vshrl.u32 %v256, 7
    %v258 = vsub.s32 3, %v257
    %v259 = vrot.slane %v242, %v258
    %v264 = vmul.f32 %v241, %v247
    %v265 = vmul.f32 %v240, %v251
    %v266 = vmul.f32 %v239, %v255
    %v267 = vmul.f32 %v238, %v259
    %268 = vrot.lane.b32.xlu0 %v223, 16
    %v269 = vpop.permute.xlu0 %268
    %270 = vrot.lane.b32.xlu0 %v224, 16
    %v271 = vpop.permute.xlu0 %270
    %272 = vrot.lane.b32.xlu0 %v225, 16
    %v273 = vpop.permute.xlu0 %272
    %274 = vrot.lane.b32.xlu0 %v226, 16
    %v275 = vpop.permute.xlu0 %274
    %vm276 = vcmp.lt.s32.totalorder %v236, 16
    %v277 = vsel %vm276, %v273, %v275
    %v278 = vsel %vm276, %v271, %v273
    %v279 = vsel %vm276, %v269, %v271
    %v280 = vsel %vm276, %v275, %v269
    %s281 = scalar_lea.vmem %s9, 4
    %v282 = vld [vmem:[%s281] sm:$0xf]
    %v284 = vlaneseq
    %v285 = vshrl.u32 %v284, 7
    %v286 = vsub.s32 0, %v285
    %v287 = vrot.slane %v282, %v286
    %v288 = vlaneseq
    %v289 = vshrl.u32 %v288, 7
    %v290 = vsub.s32 1, %v289
    %v291 = vrot.slane %v282, %v290
    %v292 = vlaneseq
    %v293 = vshrl.u32 %v292, 7
    %v294 = vsub.s32 2, %v293
    %v295 = vrot.slane %v282, %v294
    %v296 = vlaneseq
    %v297 = vshrl.u32 %v296, 7
    %v298 = vsub.s32 3, %v297
    %v299 = vrot.slane %v282, %v298
    %v304 = vmul.f32 %v280, %v287
    %v305 = vmul.f32 %v279, %v291
    %v306 = vmul.f32 %v278, %v295
    %v307 = vmul.f32 %v277, %v299
    %308 = vrot.lane.b32.xlu0 %v223, 15
    %v309 = vpop.permute.xlu0 %308
    %310 = vrot.lane.b32.xlu0 %v224, 15
    %v311 = vpop.permute.xlu0 %310
    %312 = vrot.lane.b32.xlu0 %v225, 15
    %v313 = vpop.permute.xlu0 %312
    %314 = vrot.lane.b32.xlu0 %v226, 15
    %v315 = vpop.permute.xlu0 %314
    %vm316 = vcmp.lt.s32.totalorder %v236, 15
    %v317 = vsel %vm316, %v313, %v315
    %v318 = vsel %vm316, %v311, %v313
    %v319 = vsel %vm316, %v309, %v311
    %v320 = vsel %vm316, %v315, %v309
    %s321 = scalar_lea.vmem %s9, 8
    %v322 = vld [vmem:[%s321] sm:$0xf]
    %v324 = vlaneseq
    %v325 = vshrl.u32 %v324, 7
    %v326 = vsub.s32 0, %v325
    %v327 = vrot.slane %v322, %v326
    %v328 = vlaneseq
    %v329 = vshrl.u32 %v328, 7
    %v330 = vsub.s32 1, %v329
    %v331 = vrot.slane %v322, %v330
    %v332 = vlaneseq
    %v333 = vshrl.u32 %v332, 7
    %v334 = vsub.s32 2, %v333
    %v335 = vrot.slane %v322, %v334
    %v336 = vlaneseq
    %v337 = vshrl.u32 %v336, 7
    %v338 = vsub.s32 3, %v337
    %v339 = vrot.slane %v322, %v338
    %v344 = vmul.f32 %v320, %v327
    %v345 = vmul.f32 %v319, %v331
    %v346 = vmul.f32 %v318, %v335
    %v347 = vmul.f32 %v317, %v339
    %348 = vrot.lane.b32.xlu0 %v223, 1
    %v349 = vpop.permute.xlu0 %348
    %350 = vrot.lane.b32.xlu0 %v224, 1
    %v351 = vpop.permute.xlu0 %350
    %352 = vrot.lane.b32.xlu0 %v225, 1
    %v353 = vpop.permute.xlu0 %352
    %354 = vrot.lane.b32.xlu0 %v226, 1
    %v355 = vpop.permute.xlu0 %354
    %vm356 = vcmp.lt.s32.totalorder %v236, 1
    %v357 = vsel %vm356, %v353, %v355
    %v358 = vsel %vm356, %v351, %v353
    %v359 = vsel %vm356, %v349, %v351
    %v360 = vsel %vm356, %v355, %v349
    %s361 = scalar_lea.vmem %s9, 12
    %v362 = vld [vmem:[%s361] sm:$0xf]
    %v364 = vlaneseq
    %v365 = vshrl.u32 %v364, 7
    %v366 = vsub.s32 0, %v365
    %v367 = vrot.slane %v362, %v366
    %v368 = vlaneseq
    %v369 = vshrl.u32 %v368, 7
    %v370 = vsub.s32 1, %v369
    %v371 = vrot.slane %v362, %v370
    %v372 = vlaneseq
    %v373 = vshrl.u32 %v372, 7
    %v374 = vsub.s32 2, %v373
    %v375 = vrot.slane %v362, %v374
    %v376 = vlaneseq
    %v377 = vshrl.u32 %v376, 7
    %v378 = vsub.s32 3, %v377
    %v379 = vrot.slane %v362, %v378
    %v384 = vmul.f32 %v360, %v367
    %v385 = vmul.f32 %v359, %v371
    %v386 = vmul.f32 %v358, %v375
    %v387 = vmul.f32 %v357, %v379
    %388 = vrot.lane.b32.xlu0 %v223, 127
    %v389 = vpop.permute.xlu0 %388
    %390 = vrot.lane.b32.xlu0 %v224, 127
    %v391 = vpop.permute.xlu0 %390
    %392 = vrot.lane.b32.xlu0 %v225, 127
    %v393 = vpop.permute.xlu0 %392
    %394 = vrot.lane.b32.xlu0 %v226, 127
    %v395 = vpop.permute.xlu0 %394
    %vm396 = vcmp.lt.s32.totalorder %v236, 127
    %v397 = vsel %vm396, %v393, %v395
    %v398 = vsel %vm396, %v391, %v393
    %v399 = vsel %vm396, %v389, %v391
    %v400 = vsel %vm396, %v395, %v389
    %s401 = scalar_lea.vmem %s9, 20
    %v402 = vld [vmem:[%s401] sm:$0xf]
    %v404 = vlaneseq
    %v405 = vshrl.u32 %v404, 7
    %v406 = vsub.s32 0, %v405
    %v407 = vrot.slane %v402, %v406
    %v408 = vlaneseq
    %v409 = vshrl.u32 %v408, 7
    %v410 = vsub.s32 1, %v409
    %v411 = vrot.slane %v402, %v410
    %v412 = vlaneseq
    %v413 = vshrl.u32 %v412, 7
    %v414 = vsub.s32 2, %v413
    %v415 = vrot.slane %v402, %v414
    %v416 = vlaneseq
    %v417 = vshrl.u32 %v416, 7
    %v418 = vsub.s32 3, %v417
    %v419 = vrot.slane %v402, %v418
    %v424 = vmul.f32 %v399, %v407
    %v425 = vmul.f32 %v398, %v411
    %v426 = vmul.f32 %v397, %v415
    %v427 = vmul.f32 %v400, %v419
    %428 = vrot.lane.b32.xlu0 %v223, 113
    %v429 = vpop.permute.xlu0 %428
    %430 = vrot.lane.b32.xlu0 %v224, 113
    %v431 = vpop.permute.xlu0 %430
    %432 = vrot.lane.b32.xlu0 %v225, 113
    %v433 = vpop.permute.xlu0 %432
    %434 = vrot.lane.b32.xlu0 %v226, 113
    %v435 = vpop.permute.xlu0 %434
    %vm436 = vcmp.lt.s32.totalorder %v236, 113
    %v437 = vsel %vm436, %v433, %v435
    %v438 = vsel %vm436, %v431, %v433
    %v439 = vsel %vm436, %v429, %v431
    %v440 = vsel %vm436, %v435, %v429
    %s441 = scalar_lea.vmem %s9, 24
    %v442 = vld [vmem:[%s441] sm:$0xf]
    %v444 = vlaneseq
    %v445 = vshrl.u32 %v444, 7
    %v446 = vsub.s32 0, %v445
    %v447 = vrot.slane %v442, %v446
    %v448 = vlaneseq
    %v449 = vshrl.u32 %v448, 7
    %v450 = vsub.s32 1, %v449
    %v451 = vrot.slane %v442, %v450
    %v452 = vlaneseq
    %v453 = vshrl.u32 %v452, 7
    %v454 = vsub.s32 2, %v453
    %v455 = vrot.slane %v442, %v454
    %v456 = vlaneseq
    %v457 = vshrl.u32 %v456, 7
    %v458 = vsub.s32 3, %v457
    %v459 = vrot.slane %v442, %v458
    %v464 = vmul.f32 %v439, %v447
    %v465 = vmul.f32 %v438, %v451
    %v466 = vmul.f32 %v437, %v455
    %v467 = vmul.f32 %v440, %v459
    %468 = vrot.lane.b32.xlu0 %v223, 112
    %v469 = vpop.permute.xlu0 %468
    %470 = vrot.lane.b32.xlu0 %v224, 112
    %v471 = vpop.permute.xlu0 %470
    %472 = vrot.lane.b32.xlu0 %v225, 112
    %v473 = vpop.permute.xlu0 %472
    %474 = vrot.lane.b32.xlu0 %v226, 112
    %v475 = vpop.permute.xlu0 %474
    %vm476 = vcmp.lt.s32.totalorder %v236, 112
    %v477 = vsel %vm476, %v473, %v475
    %v478 = vsel %vm476, %v471, %v473
    %v479 = vsel %vm476, %v469, %v471
    %v480 = vsel %vm476, %v475, %v469
    %s481 = scalar_lea.vmem %s9, 28
    %v482 = vld [vmem:[%s481] sm:$0xf]
    %v484 = vlaneseq
    %v485 = vshrl.u32 %v484, 7
    %v486 = vsub.s32 0, %v485
    %v487 = vrot.slane %v482, %v486
    %v488 = vlaneseq
    %v489 = vshrl.u32 %v488, 7
    %v490 = vsub.s32 1, %v489
    %v491 = vrot.slane %v482, %v490
    %v492 = vlaneseq
    %v493 = vshrl.u32 %v492, 7
    %v494 = vsub.s32 2, %v493
    %v495 = vrot.slane %v482, %v494
    %v496 = vlaneseq
    %v497 = vshrl.u32 %v496, 7
    %v498 = vsub.s32 3, %v497
    %v499 = vrot.slane %v482, %v498
    %v504 = vmul.f32 %v479, %v487
    %v505 = vmul.f32 %v478, %v491
    %v506 = vmul.f32 %v477, %v495
    %v507 = vmul.f32 %v480, %v499
    %508 = vrot.lane.b32.xlu0 %v223, 111
    %v509 = vpop.permute.xlu0 %508
    %510 = vrot.lane.b32.xlu0 %v224, 111
    %v511 = vpop.permute.xlu0 %510
    %512 = vrot.lane.b32.xlu0 %v225, 111
    %v513 = vpop.permute.xlu0 %512
    %514 = vrot.lane.b32.xlu0 %v226, 111
    %v515 = vpop.permute.xlu0 %514
    %vm516 = vcmp.lt.s32.totalorder %v236, 111
    %v517 = vsel %vm516, %v513, %v515
    %v518 = vsel %vm516, %v511, %v513
    %v519 = vsel %vm516, %v509, %v511
    %v520 = vsel %vm516, %v515, %v509
    %s521 = scalar_lea.vmem %s9, 32
    %v522 = vld [vmem:[%s521] sm:$0xf]
    %v524 = vlaneseq
    %v525 = vshrl.u32 %v524, 7
    %v526 = vsub.s32 0, %v525
    %v527 = vrot.slane %v522, %v526
    %v528 = vlaneseq
    %v529 = vshrl.u32 %v528, 7
    %v530 = vsub.s32 1, %v529
    %v531 = vrot.slane %v522, %v530
    %v532 = vlaneseq
    %v533 = vshrl.u32 %v532, 7
    %v534 = vsub.s32 2, %v533
    %v535 = vrot.slane %v522, %v534
    %v536 = vlaneseq
    %v537 = vshrl.u32 %v536, 7
    %v538 = vsub.s32 3, %v537
    %v539 = vrot.slane %v522, %v538
    %v544 = vmul.f32 %v519, %v527
    %v545 = vmul.f32 %v518, %v531
    %v546 = vmul.f32 %v517, %v535
    %v547 = vmul.f32 %v520, %v539
    %v548 = vld [vmem:[%s3] sm:$0xff]
    %vm549 = vcmask 588800
    %v551 = vsel %vm549, %v548, 0
    %553 = vmatprep.subr.mxu0 %v265
    %554 = vmatpush1.msra.mxu0 %v264
    %555 = vmatprep.subr.mxu0 %v305
    %556 = vmatpush1.msra.mxu0 %v304
    %557 = vmatprep.subr.mxu0 %v345
    %558 = vmatpush1.msra.mxu0 %v344
    %559 = vmatprep.subr.mxu0 %v385
    %560 = vmatpush1.msra.mxu0 %v384
    %561 = vmatprep.subr.mxu0 %v224
    %562 = vmatpush1.msra.mxu0 %v223
    %563 = vmatprep.subr.mxu0 %v425
    %564 = vmatpush1.msra.mxu0 %v424
    %565 = vmatprep.subr.mxu0 %v465
    %566 = vmatpush1.msra.mxu0 %v464
    %567 = vmatprep.subr.mxu0 %v505
    %568 = vmatpush1.msra.mxu0 %v504
    %569 = vmatprep.subr.mxu0 %v545
    %570 = vmatpush1.msra.mxu0 %v544
    %571 = vmatprep.subr.mxu0 0.0
    %572 = vmatpush1.msra.mxu0 0.0
    %573 = vmatprep.subr.mxu0 0.0
    %574 = vmatpush1.msra.mxu0 0.0
    %575 = vmatprep.subr.mxu0 0.0
    %576 = vmatpush1.msra.mxu0 0.0
    %577 = vmatprep.subr.mxu0 0.0
    %578 = vmatpush1.msra.mxu0 0.0
    %579 = vmatprep.subr.mxu0 0.0
    %580 = vmatpush1.msra.mxu0 0.0
    %581 = vmatprep.subr.mxu0 0.0
    %582 = vmatpush1.msra.mxu0 0.0
    %583 = vmatprep.subr.mxu0 0.0
    %584 = vmatpush1.msra.mxu0 0.0
    %585 = vmatprep.subr.mxu0 0.0
    %586 = vmatpush1.msra.mxu0 0.0
    %587 = vmatprep.subr.mxu0 0.0
    %588 = vmatpush1.msra.mxu0 0.0
    %589 = vmatprep.subr.mxu0 0.0
    %590 = vmatpush1.msra.mxu0 0.0
    %591 = vmatprep.subr.mxu0 0.0
    %592 = vmatpush1.msra.mxu0 0.0
    %593 = vmatprep.subr.mxu0 0.0
    %594 = vmatpush1.msra.mxu0 0.0
    %595 = vmatprep.subr.mxu0 0.0
    %596 = vmatpush1.msra.mxu0 0.0
    %597 = vmatprep.subr.mxu0 0.0
    %598 = vmatpush1.msra.mxu0 0.0
    %599 = vmatprep.subr.mxu0 0.0
    %600 = vmatpush1.msra.mxu0 0.0
    %601 = vmatprep.subr.mxu0 0.0
    %602 = vmatpush1.msra.mxu0 0.0
    %603 = vmatprep.subr.mxu0 0.0
    %604 = vmatpush1.msra.mxu0 0.0
    %605 = vmatprep.subr.mxu0 0.0
    %606 = vmatpush1.msra.mxu0 0.0
    %607 = vmatprep.subr.mxu0 0.0
    %608 = vmatpush1.msra.mxu0 0.0
    %609 = vmatprep.subr.mxu0 0.0
    %610 = vmatpush1.msra.mxu0 0.0
    %611 = vmatprep.subr.mxu0 0.0
    %612 = vmatpush1.msra.mxu0 0.0
    %613 = vmatprep.subr.mxu0 0.0
    %614 = vmatpush1.msra.mxu0 0.0
    %615 = vmatprep.subr.mxu0 0.0
    %616 = vmatpush1.msra.mxu0 0.0
    %617 = vmatprep.mubr.f32.mxu0 0.0
    %618 = vmatmul.mubr.f32.gmra.mrb[0].mxu0 %v551
    %v619 = vpop.f32.mrb[0].mxu0
    %v620 = vadd.f32 0.0, %v619
    %v621 = vpop.f32.mrb[0].mxu0
    %v622 = vadd.f32 0.0, %v621
    %623 = vdwg.mxu0
    %624 = vmatprep.subr.mxu0 %v267
    %625 = vmatpush1.msra.mxu0 %v266
    %626 = vmatprep.subr.mxu0 %v307
    %627 = vmatpush1.msra.mxu0 %v306
    %628 = vmatprep.subr.mxu0 %v347
    %629 = vmatpush1.msra.mxu0 %v346
    %630 = vmatprep.subr.mxu0 %v387
    %631 = vmatpush1.msra.mxu0 %v386
    %632 = vmatprep.subr.mxu0 %v226
    %633 = vmatpush1.msra.mxu0 %v225
    %634 = vmatprep.subr.mxu0 %v427
    %635 = vmatpush1.msra.mxu0 %v426
    %636 = vmatprep.subr.mxu0 %v467
    %637 = vmatpush1.msra.mxu0 %v466
    %638 = vmatprep.subr.mxu0 %v507
    %639 = vmatpush1.msra.mxu0 %v506
    %640 = vmatprep.subr.mxu0 %v547
    %641 = vmatpush1.msra.mxu0 %v546
    %642 = vmatprep.subr.mxu0 0.0
    %643 = vmatpush1.msra.mxu0 0.0
    %644 = vmatprep.subr.mxu0 0.0
    %645 = vmatpush1.msra.mxu0 0.0
    %646 = vmatprep.subr.mxu0 0.0
    %647 = vmatpush1.msra.mxu0 0.0
    %648 = vmatprep.subr.mxu0 0.0
    %649 = vmatpush1.msra.mxu0 0.0
    %650 = vmatprep.subr.mxu0 0.0
    %651 = vmatpush1.msra.mxu0 0.0
    %652 = vmatprep.subr.mxu0 0.0
    %653 = vmatpush1.msra.mxu0 0.0
    %654 = vmatprep.subr.mxu0 0.0
    %655 = vmatpush1.msra.mxu0 0.0
    %656 = vmatprep.subr.mxu0 0.0
    %657 = vmatpush1.msra.mxu0 0.0
    %658 = vmatprep.subr.mxu0 0.0
    %659 = vmatpush1.msra.mxu0 0.0
    %660 = vmatprep.subr.mxu0 0.0
    %661 = vmatpush1.msra.mxu0 0.0
    %662 = vmatprep.subr.mxu0 0.0
    %663 = vmatpush1.msra.mxu0 0.0
    %664 = vmatprep.subr.mxu0 0.0
    %665 = vmatpush1.msra.mxu0 0.0
    %666 = vmatprep.subr.mxu0 0.0
    %667 = vmatpush1.msra.mxu0 0.0
    %668 = vmatprep.subr.mxu0 0.0
    %669 = vmatpush1.msra.mxu0 0.0
    %670 = vmatprep.subr.mxu0 0.0
    %671 = vmatpush1.msra.mxu0 0.0
    %672 = vmatprep.subr.mxu0 0.0
    %673 = vmatpush1.msra.mxu0 0.0
    %674 = vmatprep.subr.mxu0 0.0
    %675 = vmatpush1.msra.mxu0 0.0
    %676 = vmatprep.subr.mxu0 0.0
    %677 = vmatpush1.msra.mxu0 0.0
    %678 = vmatprep.subr.mxu0 0.0
    %679 = vmatpush1.msra.mxu0 0.0
    %680 = vmatprep.subr.mxu0 0.0
    %681 = vmatpush1.msra.mxu0 0.0
    %682 = vmatprep.subr.mxu0 0.0
    %683 = vmatpush1.msra.mxu0 0.0
    %684 = vmatprep.subr.mxu0 0.0
    %685 = vmatpush1.msra.mxu0 0.0
    %686 = vmatprep.subr.mxu0 0.0
    %687 = vmatpush1.msra.mxu0 0.0
    %688 = vmatprep.mubr.f32.mxu0 0.0
    %689 = vmatmul.mubr.f32.gmra.mrb[0].mxu0 %v551
    %v690 = vpop.f32.mrb[0].mxu0
    %v691 = vadd.f32 0.0, %v690
    %v692 = vpop.f32.mrb[0].mxu0
    %v693 = vadd.f32 0.0, %v692
    %694 = vdwg.mxu0
    %v695 = vld [vmem:[#allocation2] sm:$0xff]
    %v696 = vld [vmem:[#allocation2 + $0x8] sm:$0xff]
    %v697 = vld [vmem:[#allocation2 + $0x10] sm:$0xff]
    %v698 = vld [vmem:[#allocation2 + $0x18] sm:$0xff]
    %v699 = vld [vmem:[#allocation2 + $0x20] sm:$0xff]
    %v700 = vld [vmem:[#allocation2 + $0x28] sm:$0xff]
    %v701 = vld [vmem:[#allocation2 + $0x30] sm:$0xff]
    %v702 = vld [vmem:[#allocation2 + $0x38] sm:$0xff]
    %v703 = vld [vmem:[#allocation2 + $0x40] sm:$0xff]
    %v704 = vld [vmem:[#allocation2 + $0x48] sm:$0xff]
    %v705 = vld [vmem:[#allocation2 + $0x50] sm:$0xff]
    %v706 = vld [vmem:[#allocation2 + $0x58] sm:$0xff]
    %v707 = vld [vmem:[#allocation2 + $0x60] sm:$0xff]
    %v708 = vld [vmem:[#allocation2 + $0x68] sm:$0xff]
    %v709 = vld [vmem:[#allocation2 + $0x70] sm:$0xff]
    %v710 = vld [vmem:[#allocation2 + $0x78] sm:$0xff]
    %v711 = vld [vmem:[#allocation2 + $0x80] sm:$0xff]
    %v712 = vld [vmem:[#allocation2 + $0x88] sm:$0xff]
    %v713 = vld [vmem:[#allocation2 + $0x90] sm:$0xff]
    %v714 = vld [vmem:[#allocation2 + $0x98] sm:$0xff]
    %v715 = vld [vmem:[#allocation2 + $0xa0] sm:$0xff]
    %v716 = vld [vmem:[#allocation2 + $0xa8] sm:$0xff]
    %v717 = vld [vmem:[#allocation2 + $0xb0] sm:$0xff]
    %v718 = vld [vmem:[#allocation2 + $0xb8] sm:$0xff]
    %v719 = vld [vmem:[#allocation2 + $0xc0] sm:$0xff]
    %v720 = vld [vmem:[#allocation2 + $0xc8] sm:$0xff]
    %v721 = vld [vmem:[#allocation2 + $0xd0] sm:$0xff]
    %v722 = vld [vmem:[#allocation2 + $0xd8] sm:$0xff]
    %v723 = vld [vmem:[#allocation2 + $0xe0] sm:$0xff]
    %v724 = vld [vmem:[#allocation2 + $0xe8] sm:$0xff]
    %v725 = vld [vmem:[#allocation2 + $0xf0] sm:$0xff]
    %v726 = vld [vmem:[#allocation2 + $0xf8] sm:$0xff]
    %v727 = vld [vmem:[#allocation2 + $0x100] sm:$0xff]
    %v728 = vld [vmem:[#allocation2 + $0x108] sm:$0xff]
    %v729 = vld [vmem:[#allocation2 + $0x110] sm:$0xff]
    %v730 = vld [vmem:[#allocation2 + $0x118] sm:$0xff]
    %v731 = vld [vmem:[#allocation2 + $0x120] sm:$0xff]
    %v732 = vld [vmem:[#allocation2 + $0x128] sm:$0xff]
    %v733 = vld [vmem:[#allocation2 + $0x130] sm:$0xff]
    %v734 = vld [vmem:[#allocation2 + $0x138] sm:$0xff]
    %v735 = vld [vmem:[#allocation2 + $0x140] sm:$0xff]
    %v736 = vld [vmem:[#allocation2 + $0x148] sm:$0xff]
    %v737 = vld [vmem:[#allocation2 + $0x150] sm:$0xff]
    %v738 = vld [vmem:[#allocation2 + $0x158] sm:$0xff]
    %v739 = vld [vmem:[#allocation2 + $0x160] sm:$0xff]
    %v740 = vld [vmem:[#allocation2 + $0x168] sm:$0xff]
    %v741 = vld [vmem:[#allocation2 + $0x170] sm:$0xff]
    %v742 = vld [vmem:[#allocation2 + $0x178] sm:$0xff]
    %v743 = vld [vmem:[#allocation2 + $0x180] sm:$0xff]
    %v744 = vld [vmem:[#allocation2 + $0x188] sm:$0xff]
    %v745 = vld [vmem:[#allocation2 + $0x190] sm:$0xff]
    %v746 = vld [vmem:[#allocation2 + $0x198] sm:$0xff]
    %v747 = vld [vmem:[#allocation2 + $0x1a0] sm:$0xff]
    %v748 = vld [vmem:[#allocation2 + $0x1a8] sm:$0xff]
    %v749 = vld [vmem:[#allocation2 + $0x1b0] sm:$0xff]
    %v750 = vld [vmem:[#allocation2 + $0x1b8] sm:$0xff]
    %v751 = vld [vmem:[#allocation2 + $0x1c0] sm:$0xff]
    %v752 = vld [vmem:[#allocation2 + $0x1c8] sm:$0xff]
    %v753 = vld [vmem:[#allocation2 + $0x1d0] sm:$0xff]
    %v754 = vld [vmem:[#allocation2 + $0x1d8] sm:$0xff]
    %v755 = vld [vmem:[#allocation2 + $0x1e0] sm:$0xff]
    %v756 = vld [vmem:[#allocation2 + $0x1e8] sm:$0xff]
    %v757 = vld [vmem:[#allocation2 + $0x1f0] sm:$0xff]
    %v758 = vld [vmem:[#allocation2 + $0x1f8] sm:$0xff]
    %v759 = vld [vmem:[%s4] sm:$0xff]
    %761 = vset.pattern.permute.xlu0 0
    %762 = vperm.xlu0 %761, %v759
    %v763 = vpop.permute.xlu0 %762
    %765 = vmatprep.subr.mxu0 0.0
    %766 = vmatpush1.msra.mxu0 %v695
    %767 = vmatprep.subr.mxu0 0.0
    %768 = vmatpush1.msra.mxu0 %v696
    %769 = vmatprep.subr.mxu0 0.0
    %770 = vmatpush1.msra.mxu0 %v697
    %771 = vmatprep.subr.mxu0 0.0
    %772 = vmatpush1.msra.mxu0 %v698
    %773 = vmatprep.subr.mxu0 0.0
    %774 = vmatpush1.msra.mxu0 %v699
    %775 = vmatprep.subr.mxu0 0.0
    %776 = vmatpush1.msra.mxu0 %v700
    %777 = vmatprep.subr.mxu0 0.0
    %778 = vmatpush1.msra.mxu0 %v701
    %779 = vmatprep.subr.mxu0 0.0
    %780 = vmatpush1.msra.mxu0 %v702
    %781 = vmatprep.subr.mxu0 0.0
    %782 = vmatpush1.msra.mxu0 %v703
    %783 = vmatprep.subr.mxu0 0.0
    %784 = vmatpush1.msra.mxu0 %v704
    %785 = vmatprep.subr.mxu0 0.0
    %786 = vmatpush1.msra.mxu0 %v705
    %787 = vmatprep.subr.mxu0 0.0
    %788 = vmatpush1.msra.mxu0 %v706
    %789 = vmatprep.subr.mxu0 0.0
    %790 = vmatpush1.msra.mxu0 %v707
    %791 = vmatprep.subr.mxu0 0.0
    %792 = vmatpush1.msra.mxu0 %v708
    %793 = vmatprep.subr.mxu0 0.0
    %794 = vmatpush1.msra.mxu0 %v709
    %795 = vmatprep.subr.mxu0 0.0
    %796 = vmatpush1.msra.mxu0 %v710
    %797 = vmatprep.subr.mxu0 0.0
    %798 = vmatpush1.msra.mxu0 %v711
    %799 = vmatprep.subr.mxu0 0.0
    %800 = vmatpush1.msra.mxu0 %v712
    %801 = vmatprep.subr.mxu0 0.0
    %802 = vmatpush1.msra.mxu0 %v713
    %803 = vmatprep.subr.mxu0 0.0
    %804 = vmatpush1.msra.mxu0 %v714
    %805 = vmatprep.subr.mxu0 0.0
    %806 = vmatpush1.msra.mxu0 %v715
    %807 = vmatprep.subr.mxu0 0.0
    %808 = vmatpush1.msra.mxu0 %v716
    %809 = vmatprep.subr.mxu0 0.0
    %810 = vmatpush1.msra.mxu0 %v717
    %811 = vmatprep.subr.mxu0 0.0
    %812 = vmatpush1.msra.mxu0 %v718
    %813 = vmatprep.subr.mxu0 0.0
    %814 = vmatpush1.msra.mxu0 %v719
    %815 = vmatprep.subr.mxu0 0.0
    %816 = vmatpush1.msra.mxu0 %v720
    %817 = vmatprep.subr.mxu0 0.0
    %818 = vmatpush1.msra.mxu0 %v721
    %819 = vmatprep.subr.mxu0 0.0
    %820 = vmatpush1.msra.mxu0 %v722
    %821 = vmatprep.subr.mxu0 0.0
    %822 = vmatpush1.msra.mxu0 %v723
    %823 = vmatprep.subr.mxu0 0.0
    %824 = vmatpush1.msra.mxu0 %v724
    %825 = vmatprep.subr.mxu0 0.0
    %826 = vmatpush1.msra.mxu0 %v725
    %827 = vmatprep.subr.mxu0 0.0
    %828 = vmatpush1.msra.mxu0 %v726
    %829 = vmatprep.mubr.f32.mxu0 %v622
    %830 = vmatmul.mubr.f32.gmra.mrb[0].mxu0 %v620
    %v831 = vpop.f32.mrb[0].mxu0
    %v832 = vadd.f32 %v763, %v831
    %v833 = vpop.f32.mrb[0].mxu0
    %834 = vdwg.mxu0
    %835 = vmatprep.subr.mxu0 0.0
    %836 = vmatpush1.msra.mxu0 %v727
    %837 = vmatprep.subr.mxu0 0.0
    %838 = vmatpush1.msra.mxu0 %v728
    %839 = vmatprep.subr.mxu0 0.0
    %840 = vmatpush1.msra.mxu0 %v729
    %841 = vmatprep.subr.mxu0 0.0
    %842 = vmatpush1.msra.mxu0 %v730
    %843 = vmatprep.subr.mxu0 0.0
    %844 = vmatpush1.msra.mxu0 %v731
    %845 = vmatprep.subr.mxu0 0.0
    %846 = vmatpush1.msra.mxu0 %v732
    %847 = vmatprep.subr.mxu0 0.0
    %848 = vmatpush1.msra.mxu0 %v733
    %849 = vmatprep.subr.mxu0 0.0
    %850 = vmatpush1.msra.mxu0 %v734
    %851 = vmatprep.subr.mxu0 0.0
    %852 = vmatpush1.msra.mxu0 %v735
    %853 = vmatprep.subr.mxu0 0.0
    %854 = vmatpush1.msra.mxu0 %v736
    %855 = vmatprep.subr.mxu0 0.0
    %856 = vmatpush1.msra.mxu0 %v737
    %857 = vmatprep.subr.mxu0 0.0
    %858 = vmatpush1.msra.mxu0 %v738
    %859 = vmatprep.subr.mxu0 0.0
    %860 = vmatpush1.msra.mxu0 %v739
    %861 = vmatprep.subr.mxu0 0.0
    %862 = vmatpush1.msra.mxu0 %v740
    %863 = vmatprep.subr.mxu0 0.0
    %864 = vmatpush1.msra.mxu0 %v741
    %865 = vmatprep.subr.mxu0 0.0
    %866 = vmatpush1.msra.mxu0 %v742
    %867 = vmatprep.subr.mxu0 0.0
    %868 = vmatpush1.msra.mxu0 %v743
    %869 = vmatprep.subr.mxu0 0.0
    %870 = vmatpush1.msra.mxu0 %v744
    %871 = vmatprep.subr.mxu0 0.0
    %872 = vmatpush1.msra.mxu0 %v745
    %873 = vmatprep.subr.mxu0 0.0
    %874 = vmatpush1.msra.mxu0 %v746
    %875 = vmatprep.subr.mxu0 0.0
    %876 = vmatpush1.msra.mxu0 %v747
    %877 = vmatprep.subr.mxu0 0.0
    %878 = vmatpush1.msra.mxu0 %v748
    %879 = vmatprep.subr.mxu0 0.0
    %880 = vmatpush1.msra.mxu0 %v749
    %881 = vmatprep.subr.mxu0 0.0
    %882 = vmatpush1.msra.mxu0 %v750
    %883 = vmatprep.subr.mxu0 0.0
    %884 = vmatpush1.msra.mxu0 %v751
    %885 = vmatprep.subr.mxu0 0.0
    %886 = vmatpush1.msra.mxu0 %v752
    %887 = vmatprep.subr.mxu0 0.0
    %888 = vmatpush1.msra.mxu0 %v753
    %889 = vmatprep.subr.mxu0 0.0
    %890 = vmatpush1.msra.mxu0 %v754
    %891 = vmatprep.subr.mxu0 0.0
    %892 = vmatpush1.msra.mxu0 %v755
    %893 = vmatprep.subr.mxu0 0.0
    %894 = vmatpush1.msra.mxu0 %v756
    %895 = vmatprep.subr.mxu0 0.0
    %896 = vmatpush1.msra.mxu0 %v757
    %897 = vmatprep.subr.mxu0 0.0
    %898 = vmatpush1.msra.mxu0 %v758
    %899 = vmatprep.mubr.f32.mxu0 %v693
    %900 = vmatmul.mubr.f32.gmra.mrb[0].mxu0 %v691
    %v901 = vpop.f32.mrb[0].mxu0
    %v902 = vadd.f32 %v832, %v901
    %v903 = vpop.f32.mrb[0].mxu0
    %904 = vdwg.mxu0
    %v905 = vmax.f32 %v902, 0.0
    %906 = vmatprep.subr.mxu0 0.0
    %907 = vmatpush1.msra.mxu0 %v695
    %908 = vmatprep.subr.mxu0 0.0
    %909 = vmatpush1.msra.mxu0 %v696
    %910 = vmatprep.subr.mxu0 0.0
    %911 = vmatpush1.msra.mxu0 %v697
    %912 = vmatprep.subr.mxu0 0.0
    %913 = vmatpush1.msra.mxu0 %v698
    %914 = vmatprep.subr.mxu0 0.0
    %915 = vmatpush1.msra.mxu0 %v699
    %916 = vmatprep.subr.mxu0 0.0
    %917 = vmatpush1.msra.mxu0 %v700
    %918 = vmatprep.subr.mxu0 0.0
    %919 = vmatpush1.msra.mxu0 %v701
    %920 = vmatprep.subr.mxu0 0.0
    %921 = vmatpush1.msra.mxu0 %v702
    %922 = vmatprep.subr.mxu0 0.0
    %923 = vmatpush1.msra.mxu0 %v703
    %924 = vmatprep.subr.mxu0 0.0
    %925 = vmatpush1.msra.mxu0 %v704
    %926 = vmatprep.subr.mxu0 0.0
    %927 = vmatpush1.msra.mxu0 %v705
    %928 = vmatprep.subr.mxu0 0.0
    %929 = vmatpush1.msra.mxu0 %v706
    %930 = vmatprep.subr.mxu0 0.0
    %931 = vmatpush1.msra.mxu0 %v707
    %932 = vmatprep.subr.mxu0 0.0
    %933 = vmatpush1.msra.mxu0 %v708
    %934 = vmatprep.subr.mxu0 0.0
    %935 = vmatpush1.msra.mxu0 %v709
    %936 = vmatprep.subr.mxu0 0.0
    %937 = vmatpush1.msra.mxu0 %v710
    %938 = vmatprep.subr.mxu0 0.0
    %939 = vmatpush1.msra.mxu0 %v711
    %940 = vmatprep.subr.mxu0 0.0
    %941 = vmatpush1.msra.mxu0 %v712
    %942 = vmatprep.subr.mxu0 0.0
    %943 = vmatpush1.msra.mxu0 %v713
    %944 = vmatprep.subr.mxu0 0.0
    %945 = vmatpush1.msra.mxu0 %v714
    %946 = vmatprep.subr.mxu0 0.0
    %947 = vmatpush1.msra.mxu0 %v715
    %948 = vmatprep.subr.mxu0 0.0
    %949 = vmatpush1.msra.mxu0 %v716
    %950 = vmatprep.subr.mxu0 0.0
    %951 = vmatpush1.msra.mxu0 %v717
    %952 = vmatprep.subr.mxu0 0.0
    %953 = vmatpush1.msra.mxu0 %v718
    %954 = vmatprep.subr.mxu0 0.0
    %955 = vmatpush1.msra.mxu0 %v719
    %956 = vmatprep.subr.mxu0 0.0
    %957 = vmatpush1.msra.mxu0 %v720
    %958 = vmatprep.subr.mxu0 0.0
    %959 = vmatpush1.msra.mxu0 %v721
    %960 = vmatprep.subr.mxu0 0.0
    %961 = vmatpush1.msra.mxu0 %v722
    %962 = vmatprep.subr.mxu0 0.0
    %963 = vmatpush1.msra.mxu0 %v723
    %964 = vmatprep.subr.mxu0 0.0
    %965 = vmatpush1.msra.mxu0 %v724
    %966 = vmatprep.subr.mxu0 0.0
    %967 = vmatpush1.msra.mxu0 %v725
    %968 = vmatprep.subr.mxu0 0.0
    %969 = vmatpush1.msra.mxu0 %v726
    %970 = vmatprep.mubr.f32.mxu0 %v56
    %971 = vmatmul.mubr.f32.gmra.mrb[0].mxu0 %v52
    %v972 = vpop.f32.mrb[0].mxu0
    %v973 = vadd.f32 0.0, %v972
    %v974 = vpop.f32.mrb[0].mxu0
    %975 = vdwg.mxu0
    %976 = vmatprep.subr.mxu0 0.0
    %977 = vmatpush1.msra.mxu0 %v727
    %978 = vmatprep.subr.mxu0 0.0
    %979 = vmatpush1.msra.mxu0 %v728
    %980 = vmatprep.subr.mxu0 0.0
    %981 = vmatpush1.msra.mxu0 %v729
    %982 = vmatprep.subr.mxu0 0.0
    %983 = vmatpush1.msra.mxu0 %v730
    %984 = vmatprep.subr.mxu0 0.0
    %985 = vmatpush1.msra.mxu0 %v731
    %986 = vmatprep.subr.mxu0 0.0
    %987 = vmatpush1.msra.mxu0 %v732
    %988 = vmatprep.subr.mxu0 0.0
    %989 = vmatpush1.msra.mxu0 %v733
    %990 = vmatprep.subr.mxu0 0.0
    %991 = vmatpush1.msra.mxu0 %v734
    %992 = vmatprep.subr.mxu0 0.0
    %993 = vmatpush1.msra.mxu0 %v735
    %994 = vmatprep.subr.mxu0 0.0
    %995 = vmatpush1.msra.mxu0 %v736
    %996 = vmatprep.subr.mxu0 0.0
    %997 = vmatpush1.msra.mxu0 %v737
    %998 = vmatprep.subr.mxu0 0.0
    %999 = vmatpush1.msra.mxu0 %v738
    %1000 = vmatprep.subr.mxu0 0.0
    %1001 = vmatpush1.msra.mxu0 %v739
    %1002 = vmatprep.subr.mxu0 0.0
    %1003 = vmatpush1.msra.mxu0 %v740
    %1004 = vmatprep.subr.mxu0 0.0
    %1005 = vmatpush1.msra.mxu0 %v741
    %1006 = vmatprep.subr.mxu0 0.0
    %1007 = vmatpush1.msra.mxu0 %v742
    %1008 = vmatprep.subr.mxu0 0.0
    %1009 = vmatpush1.msra.mxu0 %v743
    %1010 = vmatprep.subr.mxu0 0.0
    %1011 = vmatpush1.msra.mxu0 %v744
    %1012 = vmatprep.subr.mxu0 0.0
    %1013 = vmatpush1.msra.mxu0 %v745
    %1014 = vmatprep.subr.mxu0 0.0
    %1015 = vmatpush1.msra.mxu0 %v746
    %1016 = vmatprep.subr.mxu0 0.0
    %1017 = vmatpush1.msra.mxu0 %v747
    %1018 = vmatprep.subr.mxu0 0.0
    %1019 = vmatpush1.msra.mxu0 %v748
    %1020 = vmatprep.subr.mxu0 0.0
    %1021 = vmatpush1.msra.mxu0 %v749
    %1022 = vmatprep.subr.mxu0 0.0
    %1023 = vmatpush1.msra.mxu0 %v750
    %1024 = vmatprep.subr.mxu0 0.0
    %1025 = vmatpush1.msra.mxu0 %v751
    %1026 = vmatprep.subr.mxu0 0.0
    %1027 = vmatpush1.msra.mxu0 %v752
    %1028 = vmatprep.subr.mxu0 0.0
    %1029 = vmatpush1.msra.mxu0 %v753
    %1030 = vmatprep.subr.mxu0 0.0
    %1031 = vmatpush1.msra.mxu0 %v754
    %1032 = vmatprep.subr.mxu0 0.0
    %1033 = vmatpush1.msra.mxu0 %v755
    %1034 = vmatprep.subr.mxu0 0.0
    %1035 = vmatpush1.msra.mxu0 %v756
    %1036 = vmatprep.subr.mxu0 0.0
    %1037 = vmatpush1.msra.mxu0 %v757
    %1038 = vmatprep.subr.mxu0 0.0
    %1039 = vmatpush1.msra.mxu0 %v758
    %1040 = vmatprep.mubr.f32.mxu0 %v59
    %1041 = vmatmul.mubr.f32.gmra.mrb[0].mxu0 %v54
    %v1042 = vpop.f32.mrb[0].mxu0
    %v1043 = vadd.f32 %v973, %v1042
    %v1044 = vpop.f32.mrb[0].mxu0
    %1045 = vdwg.mxu0
    %v1046 = vld [vmem:[%s7] sm:$0xff]
    %v1047 = vld [vmem:[%s8] sm:$0xff]
    %1049 = vset.pattern.permute.xlu0 0
    %1050 = vperm.xlu0 %1049, %v1047
    %v1051 = vpop.permute.xlu0 %1050
    %v1054 = vsel %vm68, %v1046, 0
    %v1057 = vsel %vm72, %v1043, 0
    %1059 = vmatprep.subr.mxu0 0.0
    %1060 = vmatpush1.msra.mxu0 %v1057
    %1061 = vmatprep.subr.mxu0 0.0
    %1062 = vmatpush1.msra.mxu0 0.0
    %1063 = vmatprep.subr.mxu0 0.0
    %1064 = vmatpush1.msra.mxu0 0.0
    %1065 = vmatprep.subr.mxu0 0.0
    %1066 = vmatpush1.msra.mxu0 0.0
    %1067 = vmatprep.subr.mxu0 0.0
    %1068 = vmatpush1.msra.mxu0 0.0
    %1069 = vmatprep.subr.mxu0 0.0
    %1070 = vmatpush1.msra.mxu0 0.0
    %1071 = vmatprep.subr.mxu0 0.0
    %1072 = vmatpush1.msra.mxu0 0.0
    %1073 = vmatprep.subr.mxu0 0.0
    %1074 = vmatpush1.msra.mxu0 0.0
    %1075 = vmatprep.subr.mxu0 0.0
    %1076 = vmatpush1.msra.mxu0 0.0
    %1077 = vmatprep.subr.mxu0 0.0
    %1078 = vmatpush1.msra.mxu0 0.0
    %1079 = vmatprep.subr.mxu0 0.0
    %1080 = vmatpush1.msra.mxu0 0.0
    %1081 = vmatprep.subr.mxu0 0.0
    %1082 = vmatpush1.msra.mxu0 0.0
    %1083 = vmatprep.subr.mxu0 0.0
    %1084 = vmatpush1.msra.mxu0 0.0
    %1085 = vmatprep.subr.mxu0 0.0
    %1086 = vmatpush1.msra.mxu0 0.0
    %1087 = vmatprep.subr.mxu0 0.0
    %1088 = vmatpush1.msra.mxu0 0.0
    %1089 = vmatprep.subr.mxu0 0.0
    %1090 = vmatpush1.msra.mxu0 0.0
    %1091 = vmatprep.subr.mxu0 0.0
    %1092 = vmatpush1.msra.mxu0 0.0
    %1093 = vmatprep.subr.mxu0 0.0
    %1094 = vmatpush1.msra.mxu0 0.0
    %1095 = vmatprep.subr.mxu0 0.0
    %1096 = vmatpush1.msra.mxu0 0.0
    %1097 = vmatprep.subr.mxu0 0.0
    %1098 = vmatpush1.msra.mxu0 0.0
    %1099 = vmatprep.subr.mxu0 0.0
    %1100 = vmatpush1.msra.mxu0 0.0
    %1101 = vmatprep.subr.mxu0 0.0
    %1102 = vmatpush1.msra.mxu0 0.0
    %1103 = vmatprep.subr.mxu0 0.0
    %1104 = vmatpush1.msra.mxu0 0.0
    %1105 = vmatprep.subr.mxu0 0.0
    %1106 = vmatpush1.msra.mxu0 0.0
    %1107 = vmatprep.subr.mxu0 0.0
    %1108 = vmatpush1.msra.mxu0 0.0
    %1109 = vmatprep.subr.mxu0 0.0
    %1110 = vmatpush1.msra.mxu0 0.0
    %1111 = vmatprep.subr.mxu0 0.0
    %1112 = vmatpush1.msra.mxu0 0.0
    %1113 = vmatprep.subr.mxu0 0.0
    %1114 = vmatpush1.msra.mxu0 0.0
    %1115 = vmatprep.subr.mxu0 0.0
    %1116 = vmatpush1.msra.mxu0 0.0
    %1117 = vmatprep.subr.mxu0 0.0
    %1118 = vmatpush1.msra.mxu0 0.0
    %1119 = vmatprep.subr.mxu0 0.0
    %1120 = vmatpush1.msra.mxu0 0.0
    %1121 = vmatprep.subr.mxu0 0.0
    %1122 = vmatpush1.msra.mxu0 0.0
    %1123 = vmatprep.mubr.f32.mxu0 0.0
    %1124 = vmatmul.mubr.f32.gmra.mrb[0].mxu0 %v1054
    %v1125 = vpop.f32.mrb[0].mxu0
    %v1126 = vadd.f32 %v1051, %v1125
    %v1127 = vpop.f32.mrb[0].mxu0
    %1128 = vdwg.mxu0
    %v1129 = vld [vmem:[%s5] sm:$0xff]
    %v1130 = vld [vmem:[%s6] sm:$0xff]
    %1132 = vset.pattern.permute.xlu0 0
    %1133 = vperm.xlu0 %1132, %v1130
    %v1134 = vpop.permute.xlu0 %1133
    %vm1136 = vcmask 64512
    %v1138 = vsel %vm1136, %v1129, 0
    %1140 = vmatprep.subr.mxu0 0.0
    %1141 = vmatpush1.msra.mxu0 %v905
    %1142 = vmatprep.subr.mxu0 0.0
    %1143 = vmatpush1.msra.mxu0 0.0
    %1144 = vmatprep.subr.mxu0 0.0
    %1145 = vmatpush1.msra.mxu0 0.0
    %1146 = vmatprep.subr.mxu0 0.0
    %1147 = vmatpush1.msra.mxu0 0.0
    %1148 = vmatprep.subr.mxu0 0.0
    %1149 = vmatpush1.msra.mxu0 0.0
    %1150 = vmatprep.subr.mxu0 0.0
    %1151 = vmatpush1.msra.mxu0 0.0
    %1152 = vmatprep.subr.mxu0 0.0
    %1153 = vmatpush1.msra.mxu0 0.0
    %1154 = vmatprep.subr.mxu0 0.0
    %1155 = vmatpush1.msra.mxu0 0.0
    %1156 = vmatprep.subr.mxu0 0.0
    %1157 = vmatpush1.msra.mxu0 0.0
    %1158 = vmatprep.subr.mxu0 0.0
    %1159 = vmatpush1.msra.mxu0 0.0
    %1160 = vmatprep.subr.mxu0 0.0
    %1161 = vmatpush1.msra.mxu0 0.0
    %1162 = vmatprep.subr.mxu0 0.0
    %1163 = vmatpush1.msra.mxu0 0.0
    %1164 = vmatprep.subr.mxu0 0.0
    %1165 = vmatpush1.msra.mxu0 0.0
    %1166 = vmatprep.subr.mxu0 0.0
    %1167 = vmatpush1.msra.mxu0 0.0
    %1168 = vmatprep.subr.mxu0 0.0
    %1169 = vmatpush1.msra.mxu0 0.0
    %1170 = vmatprep.subr.mxu0 0.0
    %1171 = vmatpush1.msra.mxu0 0.0
    %1172 = vmatprep.subr.mxu0 0.0
    %1173 = vmatpush1.msra.mxu0 0.0
    %1174 = vmatprep.subr.mxu0 0.0
    %1175 = vmatpush1.msra.mxu0 0.0
    %1176 = vmatprep.subr.mxu0 0.0
    %1177 = vmatpush1.msra.mxu0 0.0
    %1178 = vmatprep.subr.mxu0 0.0
    %1179 = vmatpush1.msra.mxu0 0.0
    %1180 = vmatprep.subr.mxu0 0.0
    %1181 = vmatpush1.msra.mxu0 0.0
    %1182 = vmatprep.subr.mxu0 0.0
    %1183 = vmatpush1.msra.mxu0 0.0
    %1184 = vmatprep.subr.mxu0 0.0
    %1185 = vmatpush1.msra.mxu0 0.0
    %1186 = vmatprep.subr.mxu0 0.0
    %1187 = vmatpush1.msra.mxu0 0.0
    %1188 = vmatprep.subr.mxu0 0.0
    %1189 = vmatpush1.msra.mxu0 0.0
    %1190 = vmatprep.subr.mxu0 0.0
    %1191 = vmatpush1.msra.mxu0 0.0
    %1192 = vmatprep.subr.mxu0 0.0
    %1193 = vmatpush1.msra.mxu0 0.0
    %1194 = vmatprep.subr.mxu0 0.0
    %1195 = vmatpush1.msra.mxu0 0.0
    %1196 = vmatprep.subr.mxu0 0.0
    %1197 = vmatpush1.msra.mxu0 0.0
    %1198 = vmatprep.subr.mxu0 0.0
    %1199 = vmatpush1.msra.mxu0 0.0
    %1200 = vmatprep.subr.mxu0 0.0
    %1201 = vmatpush1.msra.mxu0 0.0
    %1202 = vmatprep.subr.mxu0 0.0
    %1203 = vmatpush1.msra.mxu0 0.0
    %1204 = vmatprep.mubr.f32.mxu0 0.0
    %1205 = vmatmul.mubr.f32.gmra.mrb[0].mxu0 %v1138
    %v1206 = vpop.f32.mrb[0].mxu0
    %v1207 = vadd.f32 %v1134, %v1206
    %v1208 = vpop.f32.mrb[0].mxu0
    %1209 = vdwg.mxu0
    %v1210 = vadd.f32 %v1207, %v1126
    %v1211 = vmax.f32 %v1210, 0.0
    %vm1212 = vcmask 523264
    %1213 = vst.msk [vmem:[%s11] sm:$0xff] %vm1212, %v1211
    %1215 = vrot.lane.b32.xlu0 %v1211, 64
    %v1216 = vpop.permute.xlu0 %1215
    %s1218 = scalar_lea.vmem %s11, 8
    %1219 = vst.msk [vmem:[%s1218] sm:$0xff] %vm1212, %v1216
    // Predicated region
    $region50: #{bottleneck_forward.1} parent=1 // pred_check
      _
    $region51: #{bottleneck_forward.1} parent=1 // pred_check_branch
      %1221 = sbr.rel (0) target = $region53
    $region52: #{bottleneck_forward.1} parent=1 // pred_region
      _
    $region53: #{bottleneck_forward.1} parent=1 // pred_fallthru
      _
    // Predicated region
    $region54: #{bottleneck_forward.1} parent=1 // pred_check
      _
    $region55: #{bottleneck_forward.1} parent=1 // pred_check_branch
      %1223 = sbr.rel (0) target = $region57
    $region56: #{bottleneck_forward.1} parent=1 // pred_region
      _
    $region57: #{bottleneck_forward.1} parent=1 // pred_fallthru
      _
    %1224 = vsyncpa [#allocation3], 1

</llo_original>
